<compile_context>
chip_gen: v6e
topology: v6e:2x2x1
jax: 0.10.0
libtpu: 0.0.40
codegen_flags: <defaults>
</compile_context>

<pallas_src>
import math
import functools

import jax
import jax.numpy as jnp
from jax.experimental import pallas as pl
from jax.experimental.pallas import tpu as pltpu

PAD = 128  # lane-dense width for the activation slab, weight slab and output


# ----------------------------- in-kernel math -----------------------------

def _leaky_relu(x, slope=0.01):
    return jnp.where(x >= 0, x, slope * x)


def _erf_approx(x):
    # Abramowitz & Stegun 7.1.26, max abs error ~1.5e-7. Built from exp/mul/add only.
    p = 0.3275911
    a1, a2, a3, a4, a5 = 0.254829592, -0.284496736, 1.421413741, -1.453152027, 1.061405429
    ax = jnp.abs(x)
    t = 1.0 / (1.0 + p * ax)
    poly = ((((a5 * t + a4) * t + a3) * t + a2) * t + a1) * t
    y = 1.0 - poly * jnp.exp(-ax * ax)
    return jnp.where(x >= 0, y, -y)


def _gelu_exact(x):
    # PyTorch nn.GELU() default (erf-based, exact to ~1e-7 here)
    return 0.5 * x * (1.0 + _erf_approx(x * (1.0 / math.sqrt(2.0))))


# ----------------------------- packed slab layout -----------------------------

def make_layout(input_dim, mlp_dim, nb):
    """Static row offsets of every sub-weight inside the single [ROWS, 128] slab."""
    D = mlp_dim
    lay = {}
    r = 0

    def add(name, rows):
        nonlocal r
        lay[name] = r
        r += rows

    add('t1w', PAD)          # [128, D], real data in rows 0..F-1 (fourier lanes)
    add('inw', PAD)          # [128, D], real data in rows F..F+input_dim-1 (x lanes)
    add('t2w', D)
    add('r1w', D)
    add('r2w', D)
    for i in range(nb):
        add(f'wide{i}', D)   # [D, 2D] = [layer1 | residual]
        add(f'b2w{i}', D)
    add('fw', D)             # [D, 2D]
    add('ow', 2 * D)         # [2D, 128] (cols >= end_dim are zero)

    bias_r0 = r
    bias_names = (['t1b', 'inb', 't2b', 'r1b', 'r2b']
                  + [n for i in range(nb) for n in (f'bwide{i}', f'b2b{i}')]
                  + ['fb', 'ob'])
    bias_index = {n: i for i, n in enumerate(bias_names)}
    n_bias_rows = -(-len(bias_names) // 8) * 8
    total_rows = bias_r0 + n_bias_rows
    return lay, bias_r0, bias_index, n_bias_rows, total_rows


def pack_params(p, input_dim, mlp_dim):
    """Collapse all 20 weight/bias tensors into ONE [ROWS, 128] f32 slab. Call once."""
    D = mlp_dim
    F = D // 4
    nb = p['brw'].shape[0]
    lay, bias_r0, bias_index, n_bias_rows, total_rows = make_layout(input_dim, D, nb)

    w = jnp.zeros((total_rows, PAD), jnp.float32)

    def put(w, name, mat, row_off=0):
        r0 = lay[name] + row_off
        rr, cc = mat.shape
        return w.at[r0:r0 + rr, :cc].set(mat)

    w = put(w, 't1w', p['t1w'])                 # rows 0..F-1
    w = put(w, 'inw', p['inw'], row_off=F)      # rows F..F+input_dim-1 (align with x lanes)
    w = put(w, 't2w', p['t2w'])
    w = put(w, 'r1w', p['r1w'])
    w = put(w, 'r2w', p['r2w'])
    for i in range(nb):
        # [layer1 | residual] so the critical-path slice is lanes 0..D-1
        w = put(w, f'wide{i}', jnp.concatenate([p['b1w'][i], p['brw'][i]], axis=1))
        w = put(w, f'b2w{i}', p['b2w'][i])
    w = put(w, 'fw', p['fw'])
    w = put(w, 'ow', p['ow'])

    def putb(w, name, vec):
        r0 = bias_r0 + bias_index[name]
        return w.at[r0:r0 + 1, :vec.shape[1]].set(vec)

    w = putb(w, 't1b', p['t1b'])
    w = putb(w, 'inb', p['inb'])
    w = putb(w, 't2b', p['t2b'])
    w = putb(w, 'r1b', p['r1b'])
    w = putb(w, 'r2b', p['r2b'])
    for i in range(nb):
        w = putb(w, f'bwide{i}', jnp.concatenate([p['b1b'][i], p['brb'][i]], axis=1))
        w = putb(w, f'b2b{i}', p['b2b'][i])
    w = putb(w, 'fb', p['fb'])
    w = putb(w, 'ob', p['ob'])
    return w, lay, bias_r0, bias_index, n_bias_rows


def build_act(t, x, F, input_dim):
    """Merge t and inputs into one lane-padded [B, 128] operand (one DMA)."""
    B = x.shape[0]
    act = jnp.zeros((B, PAD), jnp.float32)
    act = act.at[:, :F].set(jnp.broadcast_to(t[:, None].astype(jnp.float32), (B, F)))
    act = act.at[:, F:F + input_dim].set(x.astype(jnp.float32))
    return act


# ----------------------------- kernel -----------------------------

def resnet_kernel(act_ref, w_ref, out_ref, *, F, D, nb, lay, bias_r0, bias_index,
                  n_bias_rows):
    dot = functools.partial(jnp.dot, preferred_element_type=jnp.float32)
    B = act_ref.shape[0]
    half = F // 2

    def W(name, rows, cols):
        r0 = lay[name]
        return w_ref[r0:r0 + rows, :cols]          # static slice -> zero-cost view

    biases = w_ref[bias_r0:bias_r0 + n_bias_rows, :]   # load bias block once

    def bias(name, cols):
        i = bias_index[name]
        return biases[i:i + 1, :cols]

    act = act_ref[...]                               # [B, 128]: t tiled | x | zeros

    # ---- sinusoidal positional embedding on the full 128-lane vreg (EUP) ----
    col = jax.lax.broadcasted_iota(jnp.int32, (B, PAD), 1)
    emb_scale = math.log(10000.0) / (half - 1)
    k = jnp.where(col < half, col, col - half).astype(jnp.float32)
    freqs = jnp.where(col < F, jnp.exp(-emb_scale * k), 0.0)
    arg = act * freqs                                # x / zero lanes -> arg = 0
    fourier = jnp.where(col < half, jnp.sin(arg),
                        jnp.where(col < F, jnp.cos(arg), 0.0))   # [B, 128], zeros past F

    # ---- time embedding MLP: Linear -> GELU -> Linear -> LeakyReLU ----
    h = dot(fourier, W('t1w', PAD, D)) + bias('t1b', D)
    h = _gelu_exact(h)
    h = dot(h, W('t2w', D, D)) + bias('t2b', D)
    time_embed = _leaky_relu(h)

    # ---- input dense (full-slab matmul; t lanes hit zero weight rows) ----
    x_dense = _leaky_relu(dot(act, W('inw', PAD, D)) + bias('inb', D))

    # ---- initial residual path ----
    res = _leaky_relu(dot(x_dense + time_embed, W('r1w', D, D)) + bias('r1b', D))
    res = dot(res, W('r2w', D, D)) + bias('r2b', D)

    # ---- ResNetDenseBlocks (nlayers=1 each; Dropout identity in eval) ----
    layer = res
    for i in range(nb):                              # static unroll
        # one fused [D,2D] matmul: cols 0..D-1 = layer1 (critical), D..2D-1 = residual
        hw = dot(layer, W(f'wide{i}', D, 2 * D)) + bias(f'bwide{i}', 2 * D)
        hmid = _leaky_relu(hw[:, :D])                # lanes 0..D-1: no realignment
        resid = hw[:, D:2 * D]                       # off-critical lane shift
        hmid = dot(hmid, W(f'b2w{i}', D, D)) + bias(f'b2b{i}', D)
        layer = hmid + resid

    # ---- head (lane-dense padded output) ----
    h = _leaky_relu(dot(res + layer, W('fw', D, 2 * D)) + bias('fb', 2 * D))
    out_ref[...] = dot(h, W('ow', 2 * D, PAD)) + bias('ob', PAD)


# ----------------------------- params -----------------------------

def init_params(key, input_dim, end_dim, mlp_dim=32, num_layer=3):
    D = mlp_dim
    F = D // 4
    nb = num_layer - 1

    def lin(k, fan_in, fan_out):
        # PyTorch nn.Linear default init: U(-1/sqrt(fan_in), 1/sqrt(fan_in))
        kw, kb = jax.random.split(k)
        bound = 1.0 / math.sqrt(fan_in)
        w = jax.random.uniform(kw, (fan_in, fan_out), jnp.float32, -bound, bound)
        b = jax.random.uniform(kb, (1, fan_out), jnp.float32, -bound, bound)
        return w, b

    keys = iter(jax.random.split(key, 16 + 3 * nb))
    p = {}
    p['t1w'], p['t1b'] = lin(next(keys), F, D)
    p['t2w'], p['t2b'] = lin(next(keys), D, D)
    p['inw'], p['inb'] = lin(next(keys), input_dim, D)
    p['r1w'], p['r1b'] = lin(next(keys), D, D)
    p['r2w'], p['r2b'] = lin(next(keys), D, D)

    brw, brb, b1w, b1b, b2w, b2b = [], [], [], [], [], []
    for _ in range(nb):
        w, b = lin(next(keys), D, D); brw.append(w); brb.append(b)
        w, b = lin(next(keys), D, D); b1w.append(w); b1b.append(b)
        w, b = lin(next(keys), D, D); b2w.append(w); b2b.append(b)
    p['brw'] = jnp.stack(brw); p['brb'] = jnp.stack(brb)
    p['b1w'] = jnp.stack(b1w); p['b1b'] = jnp.stack(b1b)
    p['b2w'] = jnp.stack(b2w); p['b2b'] = jnp.stack(b2b)

    p['fw'], p['fb'] = lin(next(keys), D, 2 * D)
    p['ow'], p['ob'] = lin(next(keys), 2 * D, end_dim)
    return p


# ----------------------------- wrapper -----------------------------

def resnet_forward(w_slab, act_slab, *, F, D, nb, end_dim, lay, bias_r0, bias_index,
                   n_bias_rows):
    B = act_slab.shape[0]
    assert F >= 4, "sinusoidal pos-emb needs half_dim >= 2 (mlp_dim >= 16)"
    assert end_dim <= PAD

    kernel = functools.partial(resnet_kernel, F=F, D=D, nb=nb, lay=lay,
                               bias_r0=bias_r0, bias_index=bias_index,
                               n_bias_rows=n_bias_rows)

    flops = 2 * B * (2 * PAD * D + 3 * D * D + nb * (2 * D * D + D * D)
                     + 2 * D * D + 2 * D * PAD)
    bytes_accessed = 4 * (w_slab.size + act_slab.size + B * PAD)

    out_padded = pl.pallas_call(
        kernel,
        out_shape=jax.ShapeDtypeStruct((B, PAD), jnp.float32),
        in_specs=[pl.BlockSpec(memory_space=pltpu.MemorySpace.VMEM)] * 2,
        out_specs=pl.BlockSpec(memory_space=pltpu.MemorySpace.VMEM),
        cost_estimate=pl.CostEstimate(flops=flops, transcendentals=4 * B * PAD,
                                      bytes_accessed=bytes_accessed),
    )(act_slab, w_slab)
    return out_padded[:, :end_dim]


# ----------------------------- pure-JAX reference -----------------------------

def sinusoidal_pos_emb(t, dim, theta=10000.0):
    half_dim = dim // 2
    emb = math.log(theta) / (half_dim - 1)
    freqs = jnp.exp(jnp.arange(half_dim, dtype=jnp.float32) * -emb)
    arg = t[:, None] * freqs[None, :]
    return jnp.concatenate([jnp.sin(arg), jnp.cos(arg)], axis=-1)


def resnet_reference(params, inputs, t, mlp_dim):
    fourier = sinusoidal_pos_emb(t, mlp_dim // 4)

    h = fourier @ params['t1w'] + params['t1b']
    h = 0.5 * h * (1.0 + jax.scipy.special.erf(h / math.sqrt(2.0)))   # exact GELU
    h = h @ params['t2w'] + params['t2b']
    time_embed = _leaky_relu(h)

    x_dense = _leaky_relu(inputs @ params['inw'] + params['inb'])
    res = _leaky_relu((x_dense + time_embed) @ params['r1w'] + params['r1b'])
    res = res @ params['r2w'] + params['r2b']

    layer = res
    for i in range(params['brw'].shape[0]):
        resid = layer @ params['brw'][i] + params['brb'][i]
        h = _leaky_relu(layer @ params['b1w'][i] + params['b1b'][i])
        h = h @ params['b2w'][i] + params['b2b'][i]
        layer = h + resid

    h = _leaky_relu((res + layer) @ params['fw'] + params['fb'])
    return h @ params['ow'] + params['ob']


# ----------------------------- main -----------------------------

if __name__ == "__main__":
    B = 8
    INPUT_DIM = 4
    END_DIM = 4
    MLP_DIM = 32     # -> fourier_dim = 8
    NUM_LAYER = 3    # -> 2 ResNetDenseBlocks

    key = jax.random.PRNGKey(0)
    k_params, k_x, k_t = jax.random.split(key, 3)

    params = init_params(k_params, INPUT_DIM, END_DIM, MLP_DIM, NUM_LAYER)
    inputs = jax.random.normal(k_x, (B, INPUT_DIM), jnp.float32)
    t = jax.random.uniform(k_t, (B,), jnp.float32, 0.0, 100.0)

    # Pack once (hoisted out of the per-step path).
    F = MLP_DIM // 4
    NB = NUM_LAYER - 1
    w_slab, lay, bias_r0, bias_index, n_bias_rows = pack_params(params, INPUT_DIM, MLP_DIM)
    act_slab = build_act(t, inputs, F, INPUT_DIM)

    out = resnet_forward(w_slab, act_slab, F=F, D=MLP_DIM, nb=NB, end_dim=END_DIM,
                         lay=lay, bias_r0=bias_r0, bias_index=bias_index,
                         n_bias_rows=n_bias_rows)
    out = jax.block_until_ready(out)

    ref = resnet_reference(params, inputs, t, MLP_DIM)
    assert out.shape == (B, END_DIM), out.shape
    max_err = jnp.max(jnp.abs(out - ref))
    assert jnp.allclose(out, ref, rtol=2e-3, atol=2e-3), f"max abs err = {max_err}"

    print("KERNEL_OK")
</pallas_src>

<mosaic_0001>
module attributes {stable_mosaic.version = 11 : i64} {
  func.func @resnet_kernel(%arg0: memref<8x128xf32, #tpu.memory_space<vmem>>, %arg1: memref<592x128xf32, #tpu.memory_space<vmem>>, %arg2: memref<8x128xf32, #tpu.memory_space<vmem>>) attributes {dimension_semantics = [], scalar_prefetch = 0 : i64, scratch_operands = 0 : i64, tpu.core_type = #tpu.core_type<tc>} {
    %c576 = arith.constant 576 : index
    %c0 = arith.constant 0 : index
    %0 = vector.load %arg1[%c576, %c0] : memref<592x128xf32, #tpu.memory_space<vmem>>, vector<16x128xf32>
    %c0_0 = arith.constant 0 : index
    %c0_1 = arith.constant 0 : index
    %1 = vector.load %arg0[%c0_0, %c0_1] : memref<8x128xf32, #tpu.memory_space<vmem>>, vector<8x128xf32>
    %2 = tpu.iota {dimensions = array<i32: 1>} : vector<8x128xi32>
    %c4_i32 = arith.constant 4 : i32
    %3 = vector.broadcast %c4_i32 : i32 to vector<8x128xi32>
    %4 = arith.cmpi slt, %2, %3 : vector<8x128xi32>
    %c4_i32_2 = arith.constant 4 : i32
    %5 = vector.broadcast %c4_i32_2 : i32 to vector<8x128xi32>
    %6 = arith.subi %2, %5 : vector<8x128xi32>
    %7 = arith.select %4, %2, %6 : vector<8x128xi1>, vector<8x128xi32>
    %8 = arith.sitofp %7 : vector<8x128xi32> to vector<8x128xf32>
    %c8_i32 = arith.constant 8 : i32
    %9 = vector.broadcast %c8_i32 : i32 to vector<8x128xi32>
    %10 = arith.cmpi slt, %2, %9 : vector<8x128xi32>
    %cst = arith.constant -3.07011342 : f32
    %11 = vector.broadcast %cst : f32 to vector<8x128xf32>
    %12 = arith.mulf %11, %8 : vector<8x128xf32>
    %13 = math.exp %12 : vector<8x128xf32>
    %cst_3 = arith.constant 0.000000e+00 : f32
    %14 = vector.broadcast %cst_3 : f32 to vector<8x128xf32>
    %15 = arith.select %10, %13, %14 : vector<8x128xi1>, vector<8x128xf32>
    %16 = arith.mulf %1, %15 : vector<8x128xf32>
    %c4_i32_4 = arith.constant 4 : i32
    %17 = vector.broadcast %c4_i32_4 : i32 to vector<8x128xi32>
    %18 = arith.cmpi slt, %2, %17 : vector<8x128xi32>
    %19 = math.sin %16 : vector<8x128xf32>
    %c8_i32_5 = arith.constant 8 : i32
    %20 = vector.broadcast %c8_i32_5 : i32 to vector<8x128xi32>
    %21 = arith.cmpi slt, %2, %20 : vector<8x128xi32>
    %22 = math.cos %16 : vector<8x128xf32>
    %cst_6 = arith.constant 0.000000e+00 : f32
    %23 = vector.broadcast %cst_6 : f32 to vector<8x128xf32>
    %24 = arith.select %21, %22, %23 : vector<8x128xi1>, vector<8x128xf32>
    %25 = arith.select %18, %19, %24 : vector<8x128xi1>, vector<8x128xf32>
    %c0_7 = arith.constant 0 : index
    %c0_8 = arith.constant 0 : index
    %26 = vector.load %arg1[%c0_7, %c0_8] : memref<592x128xf32, #tpu.memory_space<vmem>>, vector<128x32xf32>
    %cst_9 = arith.constant dense<0.000000e+00> : vector<8x32xf32>
    %27 = tpu.matmul %25, %26, %cst_9 {dimension_numbers = #tpu.dot_dimension_numbers<[1], [0], [0], [1], [0, 0, 1, 1], [], []>} : vector<8x128xf32>, vector<128x32xf32>, vector<8x32xf32> -> vector<8x32xf32>
    %28 = vector.extract_strided_slice %0 {offsets = [0, 0], sizes = [1, 32], strides = [1, 1]} : vector<16x128xf32> to vector<1x32xf32>
    %29 = vector.broadcast %28 : vector<1x32xf32> to vector<8x32xf32>
    %30 = arith.addf %27, %29 : vector<8x32xf32>
    %cst_10 = arith.constant 5.000000e-01 : f32
    %31 = vector.broadcast %cst_10 : f32 to vector<8x32xf32>
    %32 = arith.mulf %31, %30 : vector<8x32xf32>
    %cst_11 = arith.constant 0.707106769 : f32
    %33 = vector.broadcast %cst_11 : f32 to vector<8x32xf32>
    %34 = arith.mulf %30, %33 : vector<8x32xf32>
    %35 = math.absf %34 : vector<8x32xf32>
    %cst_12 = arith.constant 0.327591091 : f32
    %36 = vector.broadcast %cst_12 : f32 to vector<8x32xf32>
    %37 = arith.mulf %36, %35 : vector<8x32xf32>
    %cst_13 = arith.constant 1.000000e+00 : f32
    %38 = vector.broadcast %cst_13 : f32 to vector<8x32xf32>
    %39 = arith.addf %38, %37 : vector<8x32xf32>
    %cst_14 = arith.constant 1.000000e+00 : f32
    %40 = vector.broadcast %cst_14 : f32 to vector<8x32xf32>
    %41 = arith.divf %40, %39 : vector<8x32xf32>
    %cst_15 = arith.constant 1.06140542 : f32
    %42 = vector.broadcast %cst_15 : f32 to vector<8x32xf32>
    %43 = arith.mulf %42, %41 : vector<8x32xf32>
    %cst_16 = arith.constant -1.45315206 : f32
    %44 = vector.broadcast %cst_16 : f32 to vector<8x32xf32>
    %45 = arith.addf %43, %44 : vector<8x32xf32>
    %46 = arith.mulf %45, %41 : vector<8x32xf32>
    %cst_17 = arith.constant 1.42141378 : f32
    %47 = vector.broadcast %cst_17 : f32 to vector<8x32xf32>
    %48 = arith.addf %46, %47 : vector<8x32xf32>
    %49 = arith.mulf %48, %41 : vector<8x32xf32>
    %cst_18 = arith.constant -0.284496725 : f32
    %50 = vector.broadcast %cst_18 : f32 to vector<8x32xf32>
    %51 = arith.addf %49, %50 : vector<8x32xf32>
    %52 = arith.mulf %51, %41 : vector<8x32xf32>
    %cst_19 = arith.constant 0.254829586 : f32
    %53 = vector.broadcast %cst_19 : f32 to vector<8x32xf32>
    %54 = arith.addf %52, %53 : vector<8x32xf32>
    %55 = arith.mulf %54, %41 : vector<8x32xf32>
    %cst_20 = arith.constant 0.000000e+00 : f32
    %56 = vector.broadcast %cst_20 : f32 to vector<8x32xf32>
    %57 = arith.subf %56, %35 : vector<8x32xf32>
    %58 = arith.mulf %57, %35 : vector<8x32xf32>
    %59 = math.exp %58 : vector<8x32xf32>
    %60 = arith.mulf %55, %59 : vector<8x32xf32>
    %cst_21 = arith.constant 1.000000e+00 : f32
    %61 = vector.broadcast %cst_21 : f32 to vector<8x32xf32>
    %62 = arith.subf %61, %60 : vector<8x32xf32>
    %cst_22 = arith.constant 0.000000e+00 : f32
    %63 = vector.broadcast %cst_22 : f32 to vector<8x32xf32>
    %64 = arith.cmpf oge, %34, %63 : vector<8x32xf32>
    %cst_23 = arith.constant 0.000000e+00 : f32
    %65 = vector.broadcast %cst_23 : f32 to vector<8x32xf32>
    %66 = arith.subf %65, %62 : vector<8x32xf32>
    %67 = arith.select %64, %62, %66 : vector<8x32xi1>, vector<8x32xf32>
    %cst_24 = arith.constant 1.000000e+00 : f32
    %68 = vector.broadcast %cst_24 : f32 to vector<8x32xf32>
    %69 = arith.addf %68, %67 : vector<8x32xf32>
    %70 = arith.mulf %32, %69 : vector<8x32xf32>
    %c256 = arith.constant 256 : index
    %c0_25 = arith.constant 0 : index
    %71 = vector.load %arg1[%c256, %c0_25] : memref<592x128xf32, #tpu.memory_space<vmem>>, vector<32x32xf32>
    %cst_26 = arith.constant dense<0.000000e+00> : vector<8x32xf32>
    %72 = tpu.matmul %70, %71, %cst_26 {dimension_numbers = #tpu.dot_dimension_numbers<[1], [0], [0], [1], [0, 0, 1, 1], [], []>} : vector<8x32xf32>, vector<32x32xf32>, vector<8x32xf32> -> vector<8x32xf32>
    %73 = vector.extract_strided_slice %0 {offsets = [2, 0], sizes = [1, 32], strides = [1, 1]} : vector<16x128xf32> to vector<1x32xf32>
    %74 = vector.broadcast %73 : vector<1x32xf32> to vector<8x32xf32>
    %75 = arith.addf %72, %74 : vector<8x32xf32>
    %cst_27 = arith.constant 0.000000e+00 : f32
    %76 = vector.broadcast %cst_27 : f32 to vector<8x32xf32>
    %77 = arith.cmpf oge, %75, %76 : vector<8x32xf32>
    %cst_28 = arith.constant 0.00999999977 : f32
    %78 = vector.broadcast %cst_28 : f32 to vector<8x32xf32>
    %79 = arith.mulf %78, %75 : vector<8x32xf32>
    %80 = arith.select %77, %75, %79 : vector<8x32xi1>, vector<8x32xf32>
    %c128 = arith.constant 128 : index
    %c0_29 = arith.constant 0 : index
    %81 = vector.load %arg1[%c128, %c0_29] : memref<592x128xf32, #tpu.memory_space<vmem>>, vector<128x32xf32>
    %cst_30 = arith.constant dense<0.000000e+00> : vector<8x32xf32>
    %82 = tpu.matmul %1, %81, %cst_30 {dimension_numbers = #tpu.dot_dimension_numbers<[1], [0], [0], [1], [0, 0, 1, 1], [], []>} : vector<8x128xf32>, vector<128x32xf32>, vector<8x32xf32> -> vector<8x32xf32>
    %83 = vector.extract_strided_slice %0 {offsets = [1, 0], sizes = [1, 32], strides = [1, 1]} : vector<16x128xf32> to vector<1x32xf32>
    %84 = vector.broadcast %83 : vector<1x32xf32> to vector<8x32xf32>
    %85 = arith.addf %82, %84 : vector<8x32xf32>
    %cst_31 = arith.constant 0.000000e+00 : f32
    %86 = vector.broadcast %cst_31 : f32 to vector<8x32xf32>
    %87 = arith.cmpf oge, %85, %86 : vector<8x32xf32>
    %cst_32 = arith.constant 0.00999999977 : f32
    %88 = vector.broadcast %cst_32 : f32 to vector<8x32xf32>
    %89 = arith.mulf %88, %85 : vector<8x32xf32>
    %90 = arith.select %87, %85, %89 : vector<8x32xi1>, vector<8x32xf32>
    %91 = arith.addf %90, %80 : vector<8x32xf32>
    %c288 = arith.constant 288 : index
    %c0_33 = arith.constant 0 : index
    %92 = vector.load %arg1[%c288, %c0_33] : memref<592x128xf32, #tpu.memory_space<vmem>>, vector<32x32xf32>
    %cst_34 = arith.constant dense<0.000000e+00> : vector<8x32xf32>
    %93 = tpu.matmul %91, %92, %cst_34 {dimension_numbers = #tpu.dot_dimension_numbers<[1], [0], [0], [1], [0, 0, 1, 1], [], []>} : vector<8x32xf32>, vector<32x32xf32>, vector<8x32xf32> -> vector<8x32xf32>
    %94 = vector.extract_strided_slice %0 {offsets = [3, 0], sizes = [1, 32], strides = [1, 1]} : vector<16x128xf32> to vector<1x32xf32>
    %95 = vector.broadcast %94 : vector<1x32xf32> to vector<8x32xf32>
    %96 = arith.addf %93, %95 : vector<8x32xf32>
    %cst_35 = arith.constant 0.000000e+00 : f32
    %97 = vector.broadcast %cst_35 : f32 to vector<8x32xf32>
    %98 = arith.cmpf oge, %96, %97 : vector<8x32xf32>
    %cst_36 = arith.constant 0.00999999977 : f32
    %99 = vector.broadcast %cst_36 : f32 to vector<8x32xf32>
    %100 = arith.mulf %99, %96 : vector<8x32xf32>
    %101 = arith.select %98, %96, %100 : vector<8x32xi1>, vector<8x32xf32>
    %c320 = arith.constant 320 : index
    %c0_37 = arith.constant 0 : index
    %102 = vector.load %arg1[%c320, %c0_37] : memref<592x128xf32, #tpu.memory_space<vmem>>, vector<32x32xf32>
    %cst_38 = arith.constant dense<0.000000e+00> : vector<8x32xf32>
    %103 = tpu.matmul %101, %102, %cst_38 {dimension_numbers = #tpu.dot_dimension_numbers<[1], [0], [0], [1], [0, 0, 1, 1], [], []>} : vector<8x32xf32>, vector<32x32xf32>, vector<8x32xf32> -> vector<8x32xf32>
    %104 = vector.extract_strided_slice %0 {offsets = [4, 0], sizes = [1, 32], strides = [1, 1]} : vector<16x128xf32> to vector<1x32xf32>
    %105 = vector.broadcast %104 : vector<1x32xf32> to vector<8x32xf32>
    %106 = arith.addf %103, %105 : vector<8x32xf32>
    %c352 = arith.constant 352 : index
    %c0_39 = arith.constant 0 : index
    %107 = vector.load %arg1[%c352, %c0_39] : memref<592x128xf32, #tpu.memory_space<vmem>>, vector<32x64xf32>
    %cst_40 = arith.constant dense<0.000000e+00> : vector<8x64xf32>
    %108 = tpu.matmul %106, %107, %cst_40 {dimension_numbers = #tpu.dot_dimension_numbers<[1], [0], [0], [1], [0, 0, 1, 1], [], []>} : vector<8x32xf32>, vector<32x64xf32>, vector<8x64xf32> -> vector<8x64xf32>
    %109 = vector.extract_strided_slice %0 {offsets = [5, 0], sizes = [1, 64], strides = [1, 1]} : vector<16x128xf32> to vector<1x64xf32>
    %110 = vector.broadcast %109 : vector<1x64xf32> to vector<8x64xf32>
    %111 = arith.addf %108, %110 : vector<8x64xf32>
    %112 = vector.extract_strided_slice %111 {offsets = [0, 0], sizes = [8, 32], strides = [1, 1]} : vector<8x64xf32> to vector<8x32xf32>
    %cst_41 = arith.constant 0.000000e+00 : f32
    %113 = vector.broadcast %cst_41 : f32 to vector<8x32xf32>
    %114 = arith.cmpf oge, %112, %113 : vector<8x32xf32>
    %cst_42 = arith.constant 0.00999999977 : f32
    %115 = vector.broadcast %cst_42 : f32 to vector<8x32xf32>
    %116 = arith.mulf %115, %112 : vector<8x32xf32>
    %117 = arith.select %114, %112, %116 : vector<8x32xi1>, vector<8x32xf32>
    %118 = vector.extract_strided_slice %111 {offsets = [0, 32], sizes = [8, 32], strides = [1, 1]} : vector<8x64xf32> to vector<8x32xf32>
    %c384 = arith.constant 384 : index
    %c0_43 = arith.constant 0 : index
    %119 = vector.load %arg1[%c384, %c0_43] : memref<592x128xf32, #tpu.memory_space<vmem>>, vector<32x32xf32>
    %cst_44 = arith.constant dense<0.000000e+00> : vector<8x32xf32>
    %120 = tpu.matmul %117, %119, %cst_44 {dimension_numbers = #tpu.dot_dimension_numbers<[1], [0], [0], [1], [0, 0, 1, 1], [], []>} : vector<8x32xf32>, vector<32x32xf32>, vector<8x32xf32> -> vector<8x32xf32>
    %121 = vector.extract_strided_slice %0 {offsets = [6, 0], sizes = [1, 32], strides = [1, 1]} : vector<16x128xf32> to vector<1x32xf32>
    %122 = vector.broadcast %121 : vector<1x32xf32> to vector<8x32xf32>
    %123 = arith.addf %120, %122 : vector<8x32xf32>
    %124 = arith.addf %123, %118 : vector<8x32xf32>
    %c416 = arith.constant 416 : index
    %c0_45 = arith.constant 0 : index
    %125 = vector.load %arg1[%c416, %c0_45] : memref<592x128xf32, #tpu.memory_space<vmem>>, vector<32x64xf32>
    %cst_46 = arith.constant dense<0.000000e+00> : vector<8x64xf32>
    %126 = tpu.matmul %124, %125, %cst_46 {dimension_numbers = #tpu.dot_dimension_numbers<[1], [0], [0], [1], [0, 0, 1, 1], [], []>} : vector<8x32xf32>, vector<32x64xf32>, vector<8x64xf32> -> vector<8x64xf32>
    %127 = vector.extract_strided_slice %0 {offsets = [7, 0], sizes = [1, 64], strides = [1, 1]} : vector<16x128xf32> to vector<1x64xf32>
    %128 = vector.broadcast %127 : vector<1x64xf32> to vector<8x64xf32>
    %129 = arith.addf %126, %128 : vector<8x64xf32>
    %130 = vector.extract_strided_slice %129 {offsets = [0, 0], sizes = [8, 32], strides = [1, 1]} : vector<8x64xf32> to vector<8x32xf32>
    %cst_47 = arith.constant 0.000000e+00 : f32
    %131 = vector.broadcast %cst_47 : f32 to vector<8x32xf32>
    %132 = arith.cmpf oge, %130, %131 : vector<8x32xf32>
    %cst_48 = arith.constant 0.00999999977 : f32
    %133 = vector.broadcast %cst_48 : f32 to vector<8x32xf32>
    %134 = arith.mulf %133, %130 : vector<8x32xf32>
    %135 = arith.select %132, %130, %134 : vector<8x32xi1>, vector<8x32xf32>
    %136 = vector.extract_strided_slice %129 {offsets = [0, 32], sizes = [8, 32], strides = [1, 1]} : vector<8x64xf32> to vector<8x32xf32>
    %c448 = arith.constant 448 : index
    %c0_49 = arith.constant 0 : index
    %137 = vector.load %arg1[%c448, %c0_49] : memref<592x128xf32, #tpu.memory_space<vmem>>, vector<32x32xf32>
    %cst_50 = arith.constant dense<0.000000e+00> : vector<8x32xf32>
    %138 = tpu.matmul %135, %137, %cst_50 {dimension_numbers = #tpu.dot_dimension_numbers<[1], [0], [0], [1], [0, 0, 1, 1], [], []>} : vector<8x32xf32>, vector<32x32xf32>, vector<8x32xf32> -> vector<8x32xf32>
    %139 = vector.extract_strided_slice %0 {offsets = [8, 0], sizes = [1, 32], strides = [1, 1]} : vector<16x128xf32> to vector<1x32xf32>
    %140 = vector.broadcast %139 : vector<1x32xf32> to vector<8x32xf32>
    %141 = arith.addf %138, %140 : vector<8x32xf32>
    %142 = arith.addf %141, %136 : vector<8x32xf32>
    %143 = arith.addf %106, %142 : vector<8x32xf32>
    %c480 = arith.constant 480 : index
    %c0_51 = arith.constant 0 : index
    %144 = vector.load %arg1[%c480, %c0_51] : memref<592x128xf32, #tpu.memory_space<vmem>>, vector<32x64xf32>
    %cst_52 = arith.constant dense<0.000000e+00> : vector<8x64xf32>
    %145 = tpu.matmul %143, %144, %cst_52 {dimension_numbers = #tpu.dot_dimension_numbers<[1], [0], [0], [1], [0, 0, 1, 1], [], []>} : vector<8x32xf32>, vector<32x64xf32>, vector<8x64xf32> -> vector<8x64xf32>
    %146 = vector.extract_strided_slice %0 {offsets = [9, 0], sizes = [1, 64], strides = [1, 1]} : vector<16x128xf32> to vector<1x64xf32>
    %147 = vector.broadcast %146 : vector<1x64xf32> to vector<8x64xf32>
    %148 = arith.addf %145, %147 : vector<8x64xf32>
    %cst_53 = arith.constant 0.000000e+00 : f32
    %149 = vector.broadcast %cst_53 : f32 to vector<8x64xf32>
    %150 = arith.cmpf oge, %148, %149 : vector<8x64xf32>
    %cst_54 = arith.constant 0.00999999977 : f32
    %151 = vector.broadcast %cst_54 : f32 to vector<8x64xf32>
    %152 = arith.mulf %151, %148 : vector<8x64xf32>
    %153 = arith.select %150, %148, %152 : vector<8x64xi1>, vector<8x64xf32>
    %c512 = arith.constant 512 : index
    %c0_55 = arith.constant 0 : index
    %154 = vector.load %arg1[%c512, %c0_55] : memref<592x128xf32, #tpu.memory_space<vmem>>, vector<64x128xf32>
    %cst_56 = arith.constant dense<0.000000e+00> : vector<8x128xf32>
    %155 = tpu.matmul %153, %154, %cst_56 {dimension_numbers = #tpu.dot_dimension_numbers<[1], [0], [0], [1], [0, 0, 1, 1], [], []>} : vector<8x64xf32>, vector<64x128xf32>, vector<8x128xf32> -> vector<8x128xf32>
    %156 = vector.extract_strided_slice %0 {offsets = [10, 0], sizes = [1, 128], strides = [1, 1]} : vector<16x128xf32> to vector<1x128xf32>
    %157 = vector.broadcast %156 : vector<1x128xf32> to vector<8x128xf32>
    %158 = arith.addf %155, %157 : vector<8x128xf32>
    %c0_57 = arith.constant 0 : index
    %c0_58 = arith.constant 0 : index
    %159 = vector.load %arg2[%c0_57, %c0_58] : memref<8x128xf32, #tpu.memory_space<vmem>>, vector<8x128xf32>
    tpu.vector_store %arg2[%c0_57, %c0_58], %158 {strides = array<i32>} : memref<8x128xf32, #tpu.memory_space<vmem>>, vector<8x128xf32>,
    return
  }
}

</mosaic_0001>

<llo_original>
// kernel: tpu_custom_call.1
$region0: #{tpu_custom_call.1}
  #allocation0 [shape = 'u32[]', space=smem, size = 0x4, offset = 0x4, fixed_abs, tag = 'smem constant byte address 0x4 - core index']
  #allocation1 [shape = 'u32[144,128]{1,0:T(1,128)}', space=vmem, size = 0x12000, scoped, tag = 'internal scratch']
  %s0 = inlined_call_operand.hbm [shape: f32[8,128], index: 0, kind: input, shape index: {}]
  %s1 = inlined_call_operand.hbm [shape: f32[592,128], index: 1, kind: input, shape index: {}]
  %s2 = inlined_call_operand.hbm [shape: f32[8,128], index: 2, kind: output, shape index: {}]
  %s3 = sld [smem:[#allocation0]]
  $region26: #{tpu_custom_call.1} parent=0
    _
  %s5 = ssub.s32 1, %s3
  %s6 = scalar_select 0, %s5, %s3
  $region1: #{tpu_custom_call.1} parent=0
    #allocation2 [shape = 'u8[4096]{0}', space=vmem, size = 0x1000, scoped, tag = 'input window, operand 0, single buffered']
    #allocation3 [shape = 's32[1]{0}', space=sflag, size = 0x4, scoped, tag = 'scoped memory for tpu_custom_call.1']
    #allocation4 [shape = 's32[1]{0}', space=sflag, size = 0x4, scoped, tag = 'scoped memory for tpu_custom_call.1']
    #allocation5 [shape = 'u8[303104]{0}', space=vmem, size = 0x4a000, scoped, tag = 'input window, operand 1, single buffered']
    #allocation6 [shape = 's32[1]{0}', space=sflag, size = 0x4, scoped, tag = 'scoped memory for tpu_custom_call.1']
    #allocation7 [shape = 'u8[4096]{0}', space=vmem, size = 0x1000, scoped, tag = 'output window, operand 0, single buffered']
    %7 = vsyncpa [#allocation3], 0
    %8 = vsyncpa [#allocation6], 0
    %9 = vsyncpa [#allocation4], 0
    // Predicated region
    $region2: #{tpu_custom_call.1} parent=1 // pred_check
      _
    $region3: #{tpu_custom_call.1} parent=1 // pred_check_branch
      %11 = sbr.rel (0) target = $region5
    $region4: #{tpu_custom_call.1} parent=1 // pred_region
      %s13 = ssub.s32 128, 128
      %14 = vsyncadd [#allocation3], %s13
      %s16 = sshll.u32 [#allocation2], 4
      %s17 = int_to_ptr.vmem [resolvable:$true] %s16
      %19 = dma.hbm_to_vmem [thread:$0]  %s0, 128, %s17, [#allocation3]
    $region5: #{tpu_custom_call.1} parent=1 // pred_fallthru
      _
    // Predicated region
    $region6: #{tpu_custom_call.1} parent=1 // pred_check
      _
    $region7: #{tpu_custom_call.1} parent=1 // pred_check_branch
      %21 = sbr.rel (0) target = $region9
    $region8: #{tpu_custom_call.1} parent=1 // pred_region
      %s23 = ssub.s32 9472, 9472
      %24 = vsyncadd [#allocation6], %s23
      %s25 = sshll.u32 [#allocation5], 4
      %s26 = int_to_ptr.vmem [resolvable:$true] %s25
      %31 = dma.hbm_to_vmem [thread:$0]  %s1, 9472, %s26, [#allocation6], 128, 128, 8
    $region9: #{tpu_custom_call.1} parent=1 // pred_fallthru
      _
    // Predicated region
    $region10: #{tpu_custom_call.1} parent=1 // pred_check
      _
    $region11: #{tpu_custom_call.1} parent=1 // pred_check_branch
      %33 = sbr.rel (0) target = $region13
    $region12: #{tpu_custom_call.1} parent=1 // pred_region
      %34 = dma.done [#allocation3], 128
    $region13: #{tpu_custom_call.1} parent=1 // pred_fallthru
      _
    // Predicated region
    $region14: #{tpu_custom_call.1} parent=1 // pred_check
      _
    $region15: #{tpu_custom_call.1} parent=1 // pred_check_branch
      %36 = sbr.rel (0) target = $region17
    $region16: #{tpu_custom_call.1} parent=1 // pred_region
      %37 = dma.done [#allocation6], 9472
    $region17: #{tpu_custom_call.1} parent=1 // pred_fallthru
      _
    %v38 = vld [vmem:[#allocation5 + $0x240] sm:$0xff]
    %v39 = vld [vmem:[#allocation5 + $0x248] sm:$0xff]
    %v40 = vld [vmem:[#allocation2] sm:$0xff]
    %v41 = vlaneseq
    %v42 = vand.u32 %v41, 127
    %vm43 = vcmp.lt.s32.totalorder %v42, 4
    %v44 = vsub.s32 %v42, 4
    %v45 = vsel %vm43, %v42, %v44
    %v46 = vcvt.s32.f32 %v45
    %vm47 = vcmp.lt.s32.totalorder %v42, 8
    %v48 = vmul.f32 %v46, -3.0701134
    %v49 = vmul.f32 %v48, 1.442695
    %v50 = vpow.pop %v49
    %v51 = vsel %vm47, %v50, 0.0
    %v52 = vmul.f32 %v40, %v51
    %v53 = vand.u32 2147483647, %v52
    %vm54 = vcmp.le.f32.partialorder %v53, 0.7853982
    %vm55 = vcmp.lt.s32.totalorder %v52, 0
    %v56 = vand.u32 %v52, 2139095040
    %v57 = vshrl.u32 %v56, 23
    %v58 = vsub.s32 %v57, 127
    %v59 = vand.u32 2147483647, %v52
    %v60 = vand.u32 %v59, 8388607
    %v61 = vor.u32 %v60, 8388608
    %v62 = vsub.s32 0, %v61
    %v63 = vadd.s32 %v58, 1
    %vm64 = vcmp.gt.s32.totalorder %v63, 0
    %v65 = vsel %vm64, %v63, 0
    %v66 = vshrl.u32 %v65, 5
    %v67 = vand.u32 %v65, 31
    %v68 = vsub.s32 32, %v67
    %v69 = vshrl.u32 683565275, %v68
    %v70 = vshll.u32 683565275, %v67
    %v71 = vshrl.u32 2475754826, %v68
    %v72 = vor.u32 %v70, %v71
    %v73 = vshll.u32 2475754826, %v67
    %v74 = vshrl.u32 2131351028, %v68
    %v75 = vor.u32 %v73, %v74
    %v76 = vshll.u32 2131351028, %v67
    %v77 = vshrl.u32 2102212464, %v68
    %v78 = vor.u32 %v76, %v77
    %v79 = vshll.u32 2102212464, %v67
    %v80 = vshrl.u32 920167782, %v68
    %v81 = vor.u32 %v79, %v80
    %v82 = vshll.u32 920167782, %v67
    %v83 = vshrl.u32 1326507024, %v68
    %v84 = vor.u32 %v82, %v83
    %vm85 = vcmp.lt.s32.totalorder %v66, 1
    %vm86 = vcmp.lt.s32.totalorder %v66, 2
    %vm87 = vcmp.lt.s32.totalorder %v66, 3
    %vm88 = vcmp.lt.s32.totalorder %v66, 4
    %v89 = vsel %vm85, %v69, %v72
    %v90 = vsel %vm88, %v78, 2102212464
    %v91 = vsel %vm87, %v75, %v90
    %v92 = vsel %vm86, %v89, %v91
    %v93 = vsel %vm85, %v72, %v75
    %v94 = vsel %vm88, %v81, 920167782
    %v95 = vsel %vm87, %v78, %v94
    %v96 = vsel %vm86, %v93, %v95
    %v97 = vsel %vm85, %v75, %v78
    %v98 = vsel %vm88, %v84, 1326507024
    %v99 = vsel %vm87, %v81, %v98
    %v100 = vsel %vm86, %v97, %v99
    %v101 = vshll.u32 %v61, 8
    %v102 = vmul.u32.u64.compose %v101, %v100
    %v103 = vextract.low.u32 %v102
    %v104 = vextract.high.u32 %v102
    %v105 = vmul.u32.u64.compose %v101, %v96
    %v106 = vextract.low.u32 %v105
    %v107 = vextract.high.u32 %v105
    %v108 = vmul.u32 %v101, %v92
    %v109 = vadd.s32 %v104, %v106
    %vm110 = vc.u32 %v104, %v106
    %v111 = vadd.s32 %v107, 1
    %v112 = vsel %vm110, %v111, %v107
    %v113 = vadd.s32 %v108, %v112
    %v114 = vadd.s32 %v113, 536870912
    %v115 = vshrl.u32 %v114, 30
    %v116 = vshll.u32 %v115, 30
    %v117 = vsub.s32 %v113, %v116
    %vm118 = vcmp.lt.s32.totalorder %v117, 0
    %v119 = vsub.s32 0, %v117
    %v120 = vsel %vm118, %v119, %v117
    %v121 = vclz %v120
    %v122 = vsub.s32 %v121, 2
    %vm123 = vcmp.gt.s32.totalorder 0, %v122
    %v124 = vsel %vm123, 0, %v122
    %v125 = vsub.s32 32, %v124
    %v126 = vshll.u32 %v117, %v124
    %v127 = vshrl.u32 %v109, %v125
    %v128 = vor.u32 %v126, %v127
    %v129 = vsub.s32 4294967266, %v124
    %v130 = vadd.s32 %v129, 127
    %v131 = vshll.u32 %v130, 23
    %v132 = vor.u32 4788187, %v131
    %v133 = vand.u32 2147483647, %v132
    %v135 = vcvt.s32.f32 %v128
    %v136 = vmul.f32 %v135, %v133
    %v137 = vxor.u32 %v136, 2147483648
    %v138 = vsel %vm55, %v137, %v136
    %v139 = vsub.s32 4, %v115
    %v140 = vsel %vm55, %v139, %v115
    %v141 = vsel %vm54, %v52, %v138
    %v142 = vsel %vm54, 0, %v140
    %v143 = vcosq.f32.pop %v141
    %v144 = vsinq.f32.pop %v141
    %vm145 = vweird.f32 %v52
    %v146 = vadd.s32 %v142, 3
    %v147 = vand.u32 %v146, 3
    %vm148 = vcmp.lt.s32.totalorder %v147, 2
    %vm149 = vcmp.eq.s32.totalorder %v147, 0
    %v150 = vxor.u32 %v144, 2147483648
    %v151 = vsel %vm149, %v143, %v150
    %vm152 = vcmp.eq.s32.totalorder %v147, 2
    %v153 = vxor.u32 %v143, 2147483648
    %v154 = vsel %vm152, %v153, %v144
    %v155 = vsel %vm148, %v151, %v154
    %v156 = vsel %vm145, nan, %v155
    %v157 = vand.u32 2147483647, %v52
    %vm158 = vcmp.le.f32.partialorder %v157, 0.7853982
    %vm159 = vcmp.lt.s32.totalorder %v52, 0
    %v160 = vand.u32 %v52, 2139095040
    %v161 = vshrl.u32 %v160, 23
    %v162 = vsub.s32 %v161, 127
    %v163 = vand.u32 2147483647, %v52
    %v164 = vand.u32 %v163, 8388607
    %v165 = vor.u32 %v164, 8388608
    %v166 = vsub.s32 0, %v165
    %v167 = vadd.s32 %v162, 1
    %vm168 = vcmp.gt.s32.totalorder %v167, 0
    %v169 = vsel %vm168, %v167, 0
    %v170 = vshrl.u32 %v169, 5
    %v171 = vand.u32 %v169, 31
    %v172 = vsub.s32 32, %v171
    %v173 = vshrl.u32 683565275, %v172
    %v174 = vshll.u32 683565275, %v171
    %v175 = vshrl.u32 2475754826, %v172
    %v176 = vor.u32 %v174, %v175
    %v177 = vshll.u32 2475754826, %v171
    %v178 = vshrl.u32 2131351028, %v172
    %v179 = vor.u32 %v177, %v178
    %v180 = vshll.u32 2131351028, %v171
    %v181 = vshrl.u32 2102212464, %v172
    %v182 = vor.u32 %v180, %v181
    %v183 = vshll.u32 2102212464, %v171
    %v184 = vshrl.u32 920167782, %v172
    %v185 = vor.u32 %v183, %v184
    %v186 = vshll.u32 920167782, %v171
    %v187 = vshrl.u32 1326507024, %v172
    %v188 = vor.u32 %v186, %v187
    %vm189 = vcmp.lt.s32.totalorder %v170, 1
    %vm190 = vcmp.lt.s32.totalorder %v170, 2
    %vm191 = vcmp.lt.s32.totalorder %v170, 3
    %vm192 = vcmp.lt.s32.totalorder %v170, 4
    %v193 = vsel %vm189, %v173, %v176
    %v194 = vsel %vm192, %v182, 2102212464
    %v195 = vsel %vm191, %v179, %v194
    %v196 = vsel %vm190, %v193, %v195
    %v197 = vsel %vm189, %v176, %v179
    %v198 = vsel %vm192, %v185, 920167782
    %v199 = vsel %vm191, %v182, %v198
    %v200 = vsel %vm190, %v197, %v199
    %v201 = vsel %vm189, %v179, %v182
    %v202 = vsel %vm192, %v188, 1326507024
    %v203 = vsel %vm191, %v185, %v202
    %v204 = vsel %vm190, %v201, %v203
    %v205 = vshll.u32 %v165, 8
    %v206 = vmul.u32.u64.compose %v205, %v204
    %v207 = vextract.low.u32 %v206
    %v208 = vextract.high.u32 %v206
    %v209 = vmul.u32.u64.compose %v205, %v200
    %v210 = vextract.low.u32 %v209
    %v211 = vextract.high.u32 %v209
    %v212 = vmul.u32 %v205, %v196
    %v213 = vadd.s32 %v208, %v210
    %vm214 = vc.u32 %v208, %v210
    %v215 = vadd.s32 %v211, 1
    %v216 = vsel %vm214, %v215, %v211
    %v217 = vadd.s32 %v212, %v216
    %v218 = vadd.s32 %v217, 536870912
    %v219 = vshrl.u32 %v218, 30
    %v220 = vshll.u32 %v219, 30
    %v221 = vsub.s32 %v217, %v220
    %vm222 = vcmp.lt.s32.totalorder %v221, 0
    %v223 = vsub.s32 0, %v221
    %v224 = vsel %vm222, %v223, %v221
    %v225 = vclz %v224
    %v226 = vsub.s32 %v225, 2
    %vm227 = vcmp.gt.s32.totalorder 0, %v226
    %v228 = vsel %vm227, 0, %v226
    %v229 = vsub.s32 32, %v228
    %v230 = vshll.u32 %v221, %v228
    %v231 = vshrl.u32 %v213, %v229
    %v232 = vor.u32 %v230, %v231
    %v233 = vsub.s32 4294967266, %v228
    %v234 = vadd.s32 %v233, 127
    %v235 = vshll.u32 %v234, 23
    %v236 = vor.u32 4788187, %v235
    %v237 = vand.u32 2147483647, %v236
    %v239 = vcvt.s32.f32 %v232
    %v240 = vmul.f32 %v239, %v237
    %v241 = vxor.u32 %v240, 2147483648
    %v242 = vsel %vm159, %v241, %v240
    %v243 = vsub.s32 4, %v219
    %v244 = vsel %vm159, %v243, %v219
    %v245 = vsel %vm158, %v52, %v242
    %v246 = vsel %vm158, 0, %v244
    %v247 = vcosq.f32.pop %v245
    %v248 = vsinq.f32.pop %v245
    %vm249 = vweird.f32 %v52
    %v250 = vand.u32 %v246, 3
    %vm251 = vcmp.lt.s32.totalorder %v250, 2
    %vm252 = vcmp.eq.s32.totalorder %v250, 0
    %v253 = vxor.u32 %v248, 2147483648
    %v254 = vsel %vm252, %v247, %v253
    %vm255 = vcmp.eq.s32.totalorder %v250, 2
    %v256 = vxor.u32 %v247, 2147483648
    %v257 = vsel %vm255, %v256, %v248
    %v258 = vsel %vm251, %v254, %v257
    %v259 = vsel %vm249, nan, %v258
    %v260 = vsel %vm47, %v259, 0.0
    %v261 = vsel %vm43, %v156, %v260
    %v262 = vld [vmem:[#allocation5] sm:$0xff]
    %v263 = vld [vmem:[#allocation5 + $0x8] sm:$0xff]
    %v264 = vld [vmem:[#allocation5 + $0x10] sm:$0xff]
    %v265 = vld [vmem:[#allocation5 + $0x18] sm:$0xff]
    %v266 = vld [vmem:[#allocation5 + $0x20] sm:$0xff]
    %v267 = vld [vmem:[#allocation5 + $0x28] sm:$0xff]
    %v268 = vld [vmem:[#allocation5 + $0x30] sm:$0xff]
    %v269 = vld [vmem:[#allocation5 + $0x38] sm:$0xff]
    %v270 = vld [vmem:[#allocation5 + $0x40] sm:$0xff]
    %v271 = vld [vmem:[#allocation5 + $0x48] sm:$0xff]
    %v272 = vld [vmem:[#allocation5 + $0x50] sm:$0xff]
    %v273 = vld [vmem:[#allocation5 + $0x58] sm:$0xff]
    %v274 = vld [vmem:[#allocation5 + $0x60] sm:$0xff]
    %v275 = vld [vmem:[#allocation5 + $0x68] sm:$0xff]
    %v276 = vld [vmem:[#allocation5 + $0x70] sm:$0xff]
    %v277 = vld [vmem:[#allocation5 + $0x78] sm:$0xff]
    %v278 = vlaneseq
    %v279 = vshrl.u32 %v278, 7
    %v280 = vsub.s32 0, %v279
    %v281 = vrot.slane %v38, %v280
    %282 = vmatprep.subr.mxu0 0.0
    %283 = vmatpush1.msra.mxu0 %v277
    %284 = vmatprep.subr.mxu0 0.0
    %285 = vmatpush1.msra.mxu0 %v276
    %286 = vmatprep.subr.mxu0 0.0
    %287 = vmatpush1.msra.mxu0 %v275
    %288 = vmatprep.subr.mxu0 0.0
    %289 = vmatpush1.msra.mxu0 %v274
    %290 = vmatprep.subr.mxu0 0.0
    %291 = vmatpush1.msra.mxu0 %v273
    %292 = vmatprep.subr.mxu0 0.0
    %293 = vmatpush1.msra.mxu0 %v272
    %294 = vmatprep.subr.mxu0 0.0
    %295 = vmatpush1.msra.mxu0 %v271
    %296 = vmatprep.subr.mxu0 0.0
    %297 = vmatpush1.msra.mxu0 %v270
    %298 = vmatprep.subr.mxu0 0.0
    %299 = vmatpush1.msra.mxu0 %v269
    %300 = vmatprep.subr.mxu0 0.0
    %301 = vmatpush1.msra.mxu0 %v268
    %302 = vmatprep.subr.mxu0 0.0
    %303 = vmatpush1.msra.mxu0 %v267
    %304 = vmatprep.subr.mxu0 0.0
    %305 = vmatpush1.msra.mxu0 %v266
    %306 = vmatprep.subr.mxu0 0.0
    %307 = vmatpush1.msra.mxu0 %v265
    %308 = vmatprep.subr.mxu0 0.0
    %309 = vmatpush1.msra.mxu0 %v264
    %310 = vmatprep.subr.mxu0 0.0
    %311 = vmatpush1.msra.mxu0 %v263
    %312 = vmatprep.subr.mxu0 0.0
    %313 = vmatpush1.msra.mxu0 %v262
    %314 = vmatprep.subr.mxu0 0.0
    %315 = vmatpush2.msra.mxu0 0.0
    %316 = vmatprep.subr.mxu0 0.0
    %317 = vmatpush2.msra.mxu0 0.0
    %318 = vmatprep.subr.mxu0 0.0
    %319 = vmatpush2.msra.mxu0 0.0
    %320 = vmatprep.subr.mxu0 0.0
    %321 = vmatpush2.msra.mxu0 0.0
    %322 = vmatprep.subr.mxu0 0.0
    %323 = vmatpush2.msra.mxu0 0.0
    %324 = vmatprep.subr.mxu0 0.0
    %325 = vmatpush2.msra.mxu0 0.0
    %326 = vmatprep.subr.mxu0 0.0
    %327 = vmatpush2.msra.mxu0 0.0
    %328 = vmatprep.subr.mxu0 0.0
    %329 = vmatpush2.msra.mxu0 0.0
    %330 = vmatprep.subr.mxu0 0.0
    %331 = vmatpush2.msra.mxu0 0.0
    %332 = vmatprep.subr.mxu0 0.0
    %333 = vmatpush2.msra.mxu0 0.0
    %334 = vmatprep.subr.mxu0 0.0
    %335 = vmatpush2.msra.mxu0 0.0
    %336 = vmatprep.subr.mxu0 0.0
    %337 = vmatpush2.msra.mxu0 0.0
    %338 = vmatprep.subr.mxu0 0.0
    %339 = vmatpush2.msra.mxu0 0.0
    %340 = vmatprep.subr.mxu0 0.0
    %341 = vmatpush2.msra.mxu0 0.0
    %342 = vmatprep.subr.mxu0 0.0
    %343 = vmatpush2.msra.mxu0 0.0
    %344 = vmatprep.subr.mxu0 0.0
    %345 = vmatpush2.msra.mxu0 0.0
    %346 = vmatprep.mubr.f32.mxu0 0.0
    %347 = vmatmul.mubr.f32.gmra.mxu0 %v261
    %v348 = vpop.f32.mrf.mxu0
    %v349 = vadd.f32 %v281, %v348
    %v350 = vpop.f32.mrf.mxu0
    %351 = vdwg.mxu0
    %v352 = vmul.f32 %v349, 0.5
    %v353 = vmul.f32 %v349, 0.70710677
    %v354 = vand.u32 2147483647, %v353
    %v355 = vmul.f32 %v354, 0.3275911
    %v356 = vadd.f32 %v355, 1.0
    %v357 = vrcp.pop %v356
    %v358 = vmul.f32 1.0, %v357
    %v359 = vmul.f32 %v358, 1.0614054
    %v360 = vadd.f32 %v359, -1.4531521
    %v361 = vmul.f32 %v360, %v358
    %v362 = vadd.f32 %v361, 1.4214138
    %v363 = vmul.f32 %v362, %v358
    %v364 = vadd.f32 %v363, -0.28449672
    %v365 = vmul.f32 %v364, %v358
    %v366 = vadd.f32 %v365, 0.2548296
    %v367 = vmul.f32 %v366, %v358
    %v368 = vsub.f32 0.0, %v354
    %v369 = vmul.f32 %v368, %v354
    %v370 = vmul.f32 %v369, 1.442695
    %v371 = vpow.pop %v370
    %v372 = vmul.f32 %v367, %v371
    %v373 = vsub.f32 1.0, %v372
    %vm374 = vcmp.ge.f32.partialorder %v353, 0.0
    %v375 = vsub.f32 0.0, %v373
    %v376 = vsel %vm374, %v373, %v375
    %v377 = vadd.f32 %v376, 1.0
    %v378 = vmul.f32 %v352, %v377
    %v379 = vld [vmem:[#allocation5 + $0x100] sm:$0xff]
    %v380 = vld [vmem:[#allocation5 + $0x108] sm:$0xff]
    %v381 = vld [vmem:[#allocation5 + $0x110] sm:$0xff]
    %v382 = vld [vmem:[#allocation5 + $0x118] sm:$0xff]
    %v383 = vlaneseq
    %v384 = vshrl.u32 %v383, 7
    %v385 = vsub.s32 2, %v384
    %v386 = vrot.slane %v38, %v385
    %vm387 = vcmask 261120
    %v389 = vsel %vm387, %v378, 0
    %391 = vmatprep.subr.mxu0 0.0
    %392 = vmatpush1.msra.mxu0 0.0
    %393 = vmatprep.subr.mxu0 0.0
    %394 = vmatpush1.msra.mxu0 0.0
    %395 = vmatprep.subr.mxu0 0.0
    %396 = vmatpush1.msra.mxu0 0.0
    %397 = vmatprep.subr.mxu0 0.0
    %398 = vmatpush1.msra.mxu0 0.0
    %399 = vmatprep.subr.mxu0 0.0
    %400 = vmatpush1.msra.mxu0 0.0
    %401 = vmatprep.subr.mxu0 0.0
    %402 = vmatpush1.msra.mxu0 0.0
    %403 = vmatprep.subr.mxu0 0.0
    %404 = vmatpush1.msra.mxu0 0.0
    %405 = vmatprep.subr.mxu0 0.0
    %406 = vmatpush1.msra.mxu0 0.0
    %407 = vmatprep.subr.mxu0 0.0
    %408 = vmatpush1.msra.mxu0 0.0
    %409 = vmatprep.subr.mxu0 0.0
    %410 = vmatpush1.msra.mxu0 0.0
    %411 = vmatprep.subr.mxu0 0.0
    %412 = vmatpush1.msra.mxu0 0.0
    %413 = vmatprep.subr.mxu0 0.0
    %414 = vmatpush1.msra.mxu0 0.0
    %415 = vmatprep.subr.mxu0 0.0
    %416 = vmatpush1.msra.mxu0 %v382
    %417 = vmatprep.subr.mxu0 0.0
    %418 = vmatpush1.msra.mxu0 %v381
    %419 = vmatprep.subr.mxu0 0.0
    %420 = vmatpush1.msra.mxu0 %v380
    %421 = vmatprep.subr.mxu0 0.0
    %422 = vmatpush1.msra.mxu0 %v379
    %423 = vmatprep.subr.mxu0 0.0
    %424 = vmatpush2.msra.mxu0 0.0
    %425 = vmatprep.subr.mxu0 0.0
    %426 = vmatpush2.msra.mxu0 0.0
    %427 = vmatprep.subr.mxu0 0.0
    %428 = vmatpush2.msra.mxu0 0.0
    %429 = vmatprep.subr.mxu0 0.0
    %430 = vmatpush2.msra.mxu0 0.0
    %431 = vmatprep.subr.mxu0 0.0
    %432 = vmatpush2.msra.mxu0 0.0
    %433 = vmatprep.subr.mxu0 0.0
    %434 = vmatpush2.msra.mxu0 0.0
    %435 = vmatprep.subr.mxu0 0.0
    %436 = vmatpush2.msra.mxu0 0.0
    %437 = vmatprep.subr.mxu0 0.0
    %438 = vmatpush2.msra.mxu0 0.0
    %439 = vmatprep.subr.mxu0 0.0
    %440 = vmatpush2.msra.mxu0 0.0
    %441 = vmatprep.subr.mxu0 0.0
    %442 = vmatpush2.msra.mxu0 0.0
    %443 = vmatprep.subr.mxu0 0.0
    %444 = vmatpush2.msra.mxu0 0.0
    %445 = vmatprep.subr.mxu0 0.0
    %446 = vmatpush2.msra.mxu0 0.0
    %447 = vmatprep.subr.mxu0 0.0
    %448 = vmatpush2.msra.mxu0 0.0
    %449 = vmatprep.subr.mxu0 0.0
    %450 = vmatpush2.msra.mxu0 0.0
    %451 = vmatprep.subr.mxu0 0.0
    %452 = vmatpush2.msra.mxu0 0.0
    %453 = vmatprep.subr.mxu0 0.0
    %454 = vmatpush2.msra.mxu0 0.0
    %455 = vmatprep.mubr.f32.mxu0 0.0
    %456 = vmatmul.mubr.f32.gmra.mxu0 %v389
    %v457 = vpop.f32.mrf.mxu0
    %v458 = vadd.f32 %v386, %v457
    %v459 = vpop.f32.mrf.mxu0
    %460 = vdwg.mxu0
    %vm461 = vcmp.ge.f32.partialorder %v458, 0.0
    %v462 = vmul.f32 %v458, 0.01
    %v463 = vsel %vm461, %v458, %v462
    %v464 = vld [vmem:[#allocation5 + $0x80] sm:$0xff]
    %v465 = vld [vmem:[#allocation5 + $0x88] sm:$0xff]
    %v466 = vld [vmem:[#allocation5 + $0x90] sm:$0xff]
    %v467 = vld [vmem:[#allocation5 + $0x98] sm:$0xff]
    %v468 = vld [vmem:[#allocation5 + $0xa0] sm:$0xff]
    %v469 = vld [vmem:[#allocation5 + $0xa8] sm:$0xff]
    %v470 = vld [vmem:[#allocation5 + $0xb0] sm:$0xff]
    %v471 = vld [vmem:[#allocation5 + $0xb8] sm:$0xff]
    %v472 = vld [vmem:[#allocation5 + $0xc0] sm:$0xff]
    %v473 = vld [vmem:[#allocation5 + $0xc8] sm:$0xff]
    %v474 = vld [vmem:[#allocation5 + $0xd0] sm:$0xff]
    %v475 = vld [vmem:[#allocation5 + $0xd8] sm:$0xff]
    %v476 = vld [vmem:[#allocation5 + $0xe0] sm:$0xff]
    %v477 = vld [vmem:[#allocation5 + $0xe8] sm:$0xff]
    %v478 = vld [vmem:[#allocation5 + $0xf0] sm:$0xff]
    %v479 = vld [vmem:[#allocation5 + $0xf8] sm:$0xff]
    %v480 = vlaneseq
    %v481 = vshrl.u32 %v480, 7
    %v482 = vsub.s32 1, %v481
    %v483 = vrot.slane %v38, %v482
    %484 = vmatprep.subr.mxu0 0.0
    %485 = vmatpush1.msra.mxu0 %v479
    %486 = vmatprep.subr.mxu0 0.0
    %487 = vmatpush1.msra.mxu0 %v478
    %488 = vmatprep.subr.mxu0 0.0
    %489 = vmatpush1.msra.mxu0 %v477
    %490 = vmatprep.subr.mxu0 0.0
    %491 = vmatpush1.msra.mxu0 %v476
    %492 = vmatprep.subr.mxu0 0.0
    %493 = vmatpush1.msra.mxu0 %v475
    %494 = vmatprep.subr.mxu0 0.0
    %495 = vmatpush1.msra.mxu0 %v474
    %496 = vmatprep.subr.mxu0 0.0
    %497 = vmatpush1.msra.mxu0 %v473
    %498 = vmatprep.subr.mxu0 0.0
    %499 = vmatpush1.msra.mxu0 %v472
    %500 = vmatprep.subr.mxu0 0.0
    %501 = vmatpush1.msra.mxu0 %v471
    %502 = vmatprep.subr.mxu0 0.0
    %503 = vmatpush1.msra.mxu0 %v470
    %504 = vmatprep.subr.mxu0 0.0
    %505 = vmatpush1.msra.mxu0 %v469
    %506 = vmatprep.subr.mxu0 0.0
    %507 = vmatpush1.msra.mxu0 %v468
    %508 = vmatprep.subr.mxu0 0.0
    %509 = vmatpush1.msra.mxu0 %v467
    %510 = vmatprep.subr.mxu0 0.0
    %511 = vmatpush1.msra.mxu0 %v466
    %512 = vmatprep.subr.mxu0 0.0
    %513 = vmatpush1.msra.mxu0 %v465
    %514 = vmatprep.subr.mxu0 0.0
    %515 = vmatpush1.msra.mxu0 %v464
    %516 = vmatprep.subr.mxu0 0.0
    %517 = vmatpush2.msra.mxu0 0.0
    %518 = vmatprep.subr.mxu0 0.0
    %519 = vmatpush2.msra.mxu0 0.0
    %520 = vmatprep.subr.mxu0 0.0
    %521 = vmatpush2.msra.mxu0 0.0
    %522 = vmatprep.subr.mxu0 0.0
    %523 = vmatpush2.msra.mxu0 0.0
    %524 = vmatprep.subr.mxu0 0.0
    %525 = vmatpush2.msra.mxu0 0.0
    %526 = vmatprep.subr.mxu0 0.0
    %527 = vmatpush2.msra.mxu0 0.0
    %528 = vmatprep.subr.mxu0 0.0
    %529 = vmatpush2.msra.mxu0 0.0
    %530 = vmatprep.subr.mxu0 0.0
    %531 = vmatpush2.msra.mxu0 0.0
    %532 = vmatprep.subr.mxu0 0.0
    %533 = vmatpush2.msra.mxu0 0.0
    %534 = vmatprep.subr.mxu0 0.0
    %535 = vmatpush2.msra.mxu0 0.0
    %536 = vmatprep.subr.mxu0 0.0
    %537 = vmatpush2.msra.mxu0 0.0
    %538 = vmatprep.subr.mxu0 0.0
    %539 = vmatpush2.msra.mxu0 0.0
    %540 = vmatprep.subr.mxu0 0.0
    %541 = vmatpush2.msra.mxu0 0.0
    %542 = vmatprep.subr.mxu0 0.0
    %543 = vmatpush2.msra.mxu0 0.0
    %544 = vmatprep.subr.mxu0 0.0
    %545 = vmatpush2.msra.mxu0 0.0
    %546 = vmatprep.subr.mxu0 0.0
    %547 = vmatpush2.msra.mxu0 0.0
    %548 = vmatprep.mubr.f32.mxu0 0.0
    %549 = vmatmul.mubr.f32.gmra.mxu0 %v40
    %v550 = vpop.f32.mrf.mxu0
    %v551 = vadd.f32 %v483, %v550
    %v552 = vpop.f32.mrf.mxu0
    %553 = vdwg.mxu0
    %vm554 = vcmp.ge.f32.partialorder %v551, 0.0
    %v555 = vmul.f32 %v551, 0.01
    %v556 = vsel %vm554, %v551, %v555
    %v557 = vadd.f32 %v556, %v463
    %v558 = vld [vmem:[#allocation5 + $0x120] sm:$0xff]
    %v559 = vld [vmem:[#allocation5 + $0x128] sm:$0xff]
    %v560 = vld [vmem:[#allocation5 + $0x130] sm:$0xff]
    %v561 = vld [vmem:[#allocation5 + $0x138] sm:$0xff]
    %v562 = vlaneseq
    %v563 = vshrl.u32 %v562, 7
    %v564 = vsub.s32 3, %v563
    %v565 = vrot.slane %v38, %v564
    %v567 = vsel %vm387, %v557, 0
    %569 = vmatprep.subr.mxu0 0.0
    %570 = vmatpush1.msra.mxu0 0.0
    %571 = vmatprep.subr.mxu0 0.0
    %572 = vmatpush1.msra.mxu0 0.0
    %573 = vmatprep.subr.mxu0 0.0
    %574 = vmatpush1.msra.mxu0 0.0
    %575 = vmatprep.subr.mxu0 0.0
    %576 = vmatpush1.msra.mxu0 0.0
    %577 = vmatprep.subr.mxu0 0.0
    %578 = vmatpush1.msra.mxu0 0.0
    %579 = vmatprep.subr.mxu0 0.0
    %580 = vmatpush1.msra.mxu0 0.0
    %581 = vmatprep.subr.mxu0 0.0
    %582 = vmatpush1.msra.mxu0 0.0
    %583 = vmatprep.subr.mxu0 0.0
    %584 = vmatpush1.msra.mxu0 0.0
    %585 = vmatprep.subr.mxu0 0.0
    %586 = vmatpush1.msra.mxu0 0.0
    %587 = vmatprep.subr.mxu0 0.0
    %588 = vmatpush1.msra.mxu0 0.0
    %589 = vmatprep.subr.mxu0 0.0
    %590 = vmatpush1.msra.mxu0 0.0
    %591 = vmatprep.subr.mxu0 0.0
    %592 = vmatpush1.msra.mxu0 0.0
    %593 = vmatprep.subr.mxu0 0.0
    %594 = vmatpush1.msra.mxu0 %v561
    %595 = vmatprep.subr.mxu0 0.0
    %596 = vmatpush1.msra.mxu0 %v560
    %597 = vmatprep.subr.mxu0 0.0
    %598 = vmatpush1.msra.mxu0 %v559
    %599 = vmatprep.subr.mxu0 0.0
    %600 = vmatpush1.msra.mxu0 %v558
    %601 = vmatprep.subr.mxu0 0.0
    %602 = vmatpush2.msra.mxu0 0.0
    %603 = vmatprep.subr.mxu0 0.0
    %604 = vmatpush2.msra.mxu0 0.0
    %605 = vmatprep.subr.mxu0 0.0
    %606 = vmatpush2.msra.mxu0 0.0
    %607 = vmatprep.subr.mxu0 0.0
    %608 = vmatpush2.msra.mxu0 0.0
    %609 = vmatprep.subr.mxu0 0.0
    %610 = vmatpush2.msra.mxu0 0.0
    %611 = vmatprep.subr.mxu0 0.0
    %612 = vmatpush2.msra.mxu0 0.0
    %613 = vmatprep.subr.mxu0 0.0
    %614 = vmatpush2.msra.mxu0 0.0
    %615 = vmatprep.subr.mxu0 0.0
    %616 = vmatpush2.msra.mxu0 0.0
    %617 = vmatprep.subr.mxu0 0.0
    %618 = vmatpush2.msra.mxu0 0.0
    %619 = vmatprep.subr.mxu0 0.0
    %620 = vmatpush2.msra.mxu0 0.0
    %621 = vmatprep.subr.mxu0 0.0
    %622 = vmatpush2.msra.mxu0 0.0
    %623 = vmatprep.subr.mxu0 0.0
    %624 = vmatpush2.msra.mxu0 0.0
    %625 = vmatprep.subr.mxu0 0.0
    %626 = vmatpush2.msra.mxu0 0.0
    %627 = vmatprep.subr.mxu0 0.0
    %628 = vmatpush2.msra.mxu0 0.0
    %629 = vmatprep.subr.mxu0 0.0
    %630 = vmatpush2.msra.mxu0 0.0
    %631 = vmatprep.subr.mxu0 0.0
    %632 = vmatpush2.msra.mxu0 0.0
    %633 = vmatprep.mubr.f32.mxu0 0.0
    %634 = vmatmul.mubr.f32.gmra.mxu0 %v567
    %v635 = vpop.f32.mrf.mxu0
    %v636 = vadd.f32 %v565, %v635
    %v637 = vpop.f32.mrf.mxu0
    %638 = vdwg.mxu0
    %vm639 = vcmp.ge.f32.partialorder %v636, 0.0
    %v640 = vmul.f32 %v636, 0.01
    %v641 = vsel %vm639, %v636, %v640
    %v642 = vld [vmem:[#allocation5 + $0x140] sm:$0xff]
    %v643 = vld [vmem:[#allocation5 + $0x148] sm:$0xff]
    %v644 = vld [vmem:[#allocation5 + $0x150] sm:$0xff]
    %v645 = vld [vmem:[#allocation5 + $0x158] sm:$0xff]
    %v646 = vlaneseq
    %v647 = vshrl.u32 %v646, 7
    %v648 = vsub.s32 4, %v647
    %v649 = vrot.slane %v38, %v648
    %v651 = vsel %vm387, %v641, 0
    %653 = vmatprep.subr.mxu0 0.0
    %654 = vmatpush1.msra.mxu0 0.0
    %655 = vmatprep.subr.mxu0 0.0
    %656 = vmatpush1.msra.mxu0 0.0
    %657 = vmatprep.subr.mxu0 0.0
    %658 = vmatpush1.msra.mxu0 0.0
    %659 = vmatprep.subr.mxu0 0.0
    %660 = vmatpush1.msra.mxu0 0.0
    %661 = vmatprep.subr.mxu0 0.0
    %662 = vmatpush1.msra.mxu0 0.0
    %663 = vmatprep.subr.mxu0 0.0
    %664 = vmatpush1.msra.mxu0 0.0
    %665 = vmatprep.subr.mxu0 0.0
    %666 = vmatpush1.msra.mxu0 0.0
    %667 = vmatprep.subr.mxu0 0.0
    %668 = vmatpush1.msra.mxu0 0.0
    %669 = vmatprep.subr.mxu0 0.0
    %670 = vmatpush1.msra.mxu0 0.0
    %671 = vmatprep.subr.mxu0 0.0
    %672 = vmatpush1.msra.mxu0 0.0
    %673 = vmatprep.subr.mxu0 0.0
    %674 = vmatpush1.msra.mxu0 0.0
    %675 = vmatprep.subr.mxu0 0.0
    %676 = vmatpush1.msra.mxu0 0.0
    %677 = vmatprep.subr.mxu0 0.0
    %678 = vmatpush1.msra.mxu0 %v645
    %679 = vmatprep.subr.mxu0 0.0
    %680 = vmatpush1.msra.mxu0 %v644
    %681 = vmatprep.subr.mxu0 0.0
    %682 = vmatpush1.msra.mxu0 %v643
    %683 = vmatprep.subr.mxu0 0.0
    %684 = vmatpush1.msra.mxu0 %v642
    %685 = vmatprep.subr.mxu0 0.0
    %686 = vmatpush2.msra.mxu0 0.0
    %687 = vmatprep.subr.mxu0 0.0
    %688 = vmatpush2.msra.mxu0 0.0
    %689 = vmatprep.subr.mxu0 0.0
    %690 = vmatpush2.msra.mxu0 0.0
    %691 = vmatprep.subr.mxu0 0.0
    %692 = vmatpush2.msra.mxu0 0.0
    %693 = vmatprep.subr.mxu0 0.0
    %694 = vmatpush2.msra.mxu0 0.0
    %695 = vmatprep.subr.mxu0 0.0
    %696 = vmatpush2.msra.mxu0 0.0
    %697 = vmatprep.subr.mxu0 0.0
    %698 = vmatpush2.msra.mxu0 0.0
    %699 = vmatprep.subr.mxu0 0.0
    %700 = vmatpush2.msra.mxu0 0.0
    %701 = vmatprep.subr.mxu0 0.0
    %702 = vmatpush2.msra.mxu0 0.0
    %703 = vmatprep.subr.mxu0 0.0
    %704 = vmatpush2.msra.mxu0 0.0
    %705 = vmatprep.subr.mxu0 0.0
    %706 = vmatpush2.msra.mxu0 0.0
    %707 = vmatprep.subr.mxu0 0.0
    %708 = vmatpush2.msra.mxu0 0.0
    %709 = vmatprep.subr.mxu0 0.0
    %710 = vmatpush2.msra.mxu0 0.0
    %711 = vmatprep.subr.mxu0 0.0
    %712 = vmatpush2.msra.mxu0 0.0
    %713 = vmatprep.subr.mxu0 0.0
    %714 = vmatpush2.msra.mxu0 0.0
    %715 = vmatprep.subr.mxu0 0.0
    %716 = vmatpush2.msra.mxu0 0.0
    %717 = vmatprep.mubr.f32.mxu0 0.0
    %718 = vmatmul.mubr.f32.gmra.mxu0 %v651
    %v719 = vpop.f32.mrf.mxu0
    %v720 = vadd.f32 %v649, %v719
    %v721 = vpop.f32.mrf.mxu0
    %722 = vdwg.mxu0
    %v723 = vld [vmem:[#allocation5 + $0x160] sm:$0xff]
    %v724 = vld [vmem:[#allocation5 + $0x168] sm:$0xff]
    %v725 = vld [vmem:[#allocation5 + $0x170] sm:$0xff]
    %v726 = vld [vmem:[#allocation5 + $0x178] sm:$0xff]
    %v727 = vlaneseq
    %v728 = vshrl.u32 %v727, 7
    %v729 = vsub.s32 5, %v728
    %v730 = vrot.slane %v38, %v729
    %v732 = vsel %vm387, %v720, 0
    %734 = vmatprep.subr.mxu0 0.0
    %735 = vmatpush1.msra.mxu0 0.0
    %736 = vmatprep.subr.mxu0 0.0
    %737 = vmatpush1.msra.mxu0 0.0
    %738 = vmatprep.subr.mxu0 0.0
    %739 = vmatpush1.msra.mxu0 0.0
    %740 = vmatprep.subr.mxu0 0.0
    %741 = vmatpush1.msra.mxu0 0.0
    %742 = vmatprep.subr.mxu0 0.0
    %743 = vmatpush1.msra.mxu0 0.0
    %744 = vmatprep.subr.mxu0 0.0
    %745 = vmatpush1.msra.mxu0 0.0
    %746 = vmatprep.subr.mxu0 0.0
    %747 = vmatpush1.msra.mxu0 0.0
    %748 = vmatprep.subr.mxu0 0.0
    %749 = vmatpush1.msra.mxu0 0.0
    %750 = vmatprep.subr.mxu0 0.0
    %751 = vmatpush1.msra.mxu0 0.0
    %752 = vmatprep.subr.mxu0 0.0
    %753 = vmatpush1.msra.mxu0 0.0
    %754 = vmatprep.subr.mxu0 0.0
    %755 = vmatpush1.msra.mxu0 0.0
    %756 = vmatprep.subr.mxu0 0.0
    %757 = vmatpush1.msra.mxu0 0.0
    %758 = vmatprep.subr.mxu0 0.0
    %759 = vmatpush1.msra.mxu0 %v726
    %760 = vmatprep.subr.mxu0 0.0
    %761 = vmatpush1.msra.mxu0 %v725
    %762 = vmatprep.subr.mxu0 0.0
    %763 = vmatpush1.msra.mxu0 %v724
    %764 = vmatprep.subr.mxu0 0.0
    %765 = vmatpush1.msra.mxu0 %v723
    %766 = vmatprep.subr.mxu0 0.0
    %767 = vmatpush2.msra.mxu0 0.0
    %768 = vmatprep.subr.mxu0 0.0
    %769 = vmatpush2.msra.mxu0 0.0
    %770 = vmatprep.subr.mxu0 0.0
    %771 = vmatpush2.msra.mxu0 0.0
    %772 = vmatprep.subr.mxu0 0.0
    %773 = vmatpush2.msra.mxu0 0.0
    %774 = vmatprep.subr.mxu0 0.0
    %775 = vmatpush2.msra.mxu0 0.0
    %776 = vmatprep.subr.mxu0 0.0
    %777 = vmatpush2.msra.mxu0 0.0
    %778 = vmatprep.subr.mxu0 0.0
    %779 = vmatpush2.msra.mxu0 0.0
    %780 = vmatprep.subr.mxu0 0.0
    %781 = vmatpush2.msra.mxu0 0.0
    %782 = vmatprep.subr.mxu0 0.0
    %783 = vmatpush2.msra.mxu0 0.0
    %784 = vmatprep.subr.mxu0 0.0
    %785 = vmatpush2.msra.mxu0 0.0
    %786 = vmatprep.subr.mxu0 0.0
    %787 = vmatpush2.msra.mxu0 0.0
    %788 = vmatprep.subr.mxu0 0.0
    %789 = vmatpush2.msra.mxu0 0.0
    %790 = vmatprep.subr.mxu0 0.0
    %791 = vmatpush2.msra.mxu0 0.0
    %792 = vmatprep.subr.mxu0 0.0
    %793 = vmatpush2.msra.mxu0 0.0
    %794 = vmatprep.subr.mxu0 0.0
    %795 = vmatpush2.msra.mxu0 0.0
    %796 = vmatprep.subr.mxu0 0.0
    %797 = vmatpush2.msra.mxu0 0.0
    %798 = vmatprep.mubr.f32.mxu0 0.0
    %799 = vmatmul.mubr.f32.gmra.mxu0 %v732
    %v800 = vpop.f32.mrf.mxu0
    %v801 = vadd.f32 %v730, %v800
    %v802 = vpop.f32.mrf.mxu0
    %803 = vdwg.mxu0
    %vm804 = vcmp.ge.f32.partialorder %v801, 0.0
    %v805 = vmul.f32 %v801, 0.01
    %v806 = vsel %vm804, %v801, %v805
    %v807 = vld [vmem:[#allocation5 + $0x180] sm:$0xff]
    %v808 = vld [vmem:[#allocation5 + $0x188] sm:$0xff]
    %v809 = vld [vmem:[#allocation5 + $0x190] sm:$0xff]
    %v810 = vld [vmem:[#allocation5 + $0x198] sm:$0xff]
    %v811 = vlaneseq
    %v812 = vshrl.u32 %v811, 7
    %v813 = vsub.s32 6, %v812
    %v814 = vrot.slane %v38, %v813
    %v816 = vsel %vm387, %v806, 0
    %818 = vmatprep.subr.mxu0 0.0
    %819 = vmatpush1.msra.mxu0 0.0
    %820 = vmatprep.subr.mxu0 0.0
    %821 = vmatpush1.msra.mxu0 0.0
    %822 = vmatprep.subr.mxu0 0.0
    %823 = vmatpush1.msra.mxu0 0.0
    %824 = vmatprep.subr.mxu0 0.0
    %825 = vmatpush1.msra.mxu0 0.0
    %826 = vmatprep.subr.mxu0 0.0
    %827 = vmatpush1.msra.mxu0 0.0
    %828 = vmatprep.subr.mxu0 0.0
    %829 = vmatpush1.msra.mxu0 0.0
    %830 = vmatprep.subr.mxu0 0.0
    %831 = vmatpush1.msra.mxu0 0.0
    %832 = vmatprep.subr.mxu0 0.0
    %833 = vmatpush1.msra.mxu0 0.0
    %834 = vmatprep.subr.mxu0 0.0
    %835 = vmatpush1.msra.mxu0 0.0
    %836 = vmatprep.subr.mxu0 0.0
    %837 = vmatpush1.msra.mxu0 0.0
    %838 = vmatprep.subr.mxu0 0.0
    %839 = vmatpush1.msra.mxu0 0.0
    %840 = vmatprep.subr.mxu0 0.0
    %841 = vmatpush1.msra.mxu0 0.0
    %842 = vmatprep.subr.mxu0 0.0
    %843 = vmatpush1.msra.mxu0 %v810
    %844 = vmatprep.subr.mxu0 0.0
    %845 = vmatpush1.msra.mxu0 %v809
    %846 = vmatprep.subr.mxu0 0.0
    %847 = vmatpush1.msra.mxu0 %v808
    %848 = vmatprep.subr.mxu0 0.0
    %849 = vmatpush1.msra.mxu0 %v807
    %850 = vmatprep.subr.mxu0 0.0
    %851 = vmatpush2.msra.mxu0 0.0
    %852 = vmatprep.subr.mxu0 0.0
    %853 = vmatpush2.msra.mxu0 0.0
    %854 = vmatprep.subr.mxu0 0.0
    %855 = vmatpush2.msra.mxu0 0.0
    %856 = vmatprep.subr.mxu0 0.0
    %857 = vmatpush2.msra.mxu0 0.0
    %858 = vmatprep.subr.mxu0 0.0
    %859 = vmatpush2.msra.mxu0 0.0
    %860 = vmatprep.subr.mxu0 0.0
    %861 = vmatpush2.msra.mxu0 0.0
    %862 = vmatprep.subr.mxu0 0.0
    %863 = vmatpush2.msra.mxu0 0.0
    %864 = vmatprep.subr.mxu0 0.0
    %865 = vmatpush2.msra.mxu0 0.0
    %866 = vmatprep.subr.mxu0 0.0
    %867 = vmatpush2.msra.mxu0 0.0
    %868 = vmatprep.subr.mxu0 0.0
    %869 = vmatpush2.msra.mxu0 0.0
    %870 = vmatprep.subr.mxu0 0.0
    %871 = vmatpush2.msra.mxu0 0.0
    %872 = vmatprep.subr.mxu0 0.0
    %873 = vmatpush2.msra.mxu0 0.0
    %874 = vmatprep.subr.mxu0 0.0
    %875 = vmatpush2.msra.mxu0 0.0
    %876 = vmatprep.subr.mxu0 0.0
    %877 = vmatpush2.msra.mxu0 0.0
    %878 = vmatprep.subr.mxu0 0.0
    %879 = vmatpush2.msra.mxu0 0.0
    %880 = vmatprep.subr.mxu0 0.0
    %881 = vmatpush2.msra.mxu0 0.0
    %882 = vmatprep.mubr.f32.mxu0 0.0
    %883 = vmatmul.mubr.f32.gmra.mxu0 %v816
    %v884 = vpop.f32.mrf.mxu0
    %v885 = vadd.f32 %v814, %v884
    %v886 = vpop.f32.mrf.mxu0
    %887 = vdwg.mxu0
    %889 = vrot.lane.b32.xlu0 %v801, 96
    %v890 = vpop.permute.xlu0 %889
    %v892 = vadd.f32 %v885, %v890
    %v893 = vld [vmem:[#allocation5 + $0x1a0] sm:$0xff]
    %v894 = vld [vmem:[#allocation5 + $0x1a8] sm:$0xff]
    %v895 = vld [vmem:[#allocation5 + $0x1b0] sm:$0xff]
    %v896 = vld [vmem:[#allocation5 + $0x1b8] sm:$0xff]
    %v897 = vlaneseq
    %v898 = vshrl.u32 %v897, 7
    %v899 = vsub.s32 7, %v898
    %v900 = vrot.slane %v38, %v899
    %v902 = vsel %vm387, %v892, 0
    %904 = vmatprep.subr.mxu0 0.0
    %905 = vmatpush1.msra.mxu0 0.0
    %906 = vmatprep.subr.mxu0 0.0
    %907 = vmatpush1.msra.mxu0 0.0
    %908 = vmatprep.subr.mxu0 0.0
    %909 = vmatpush1.msra.mxu0 0.0
    %910 = vmatprep.subr.mxu0 0.0
    %911 = vmatpush1.msra.mxu0 0.0
    %912 = vmatprep.subr.mxu0 0.0
    %913 = vmatpush1.msra.mxu0 0.0
    %914 = vmatprep.subr.mxu0 0.0
    %915 = vmatpush1.msra.mxu0 0.0
    %916 = vmatprep.subr.mxu0 0.0
    %917 = vmatpush1.msra.mxu0 0.0
    %918 = vmatprep.subr.mxu0 0.0
    %919 = vmatpush1.msra.mxu0 0.0
    %920 = vmatprep.subr.mxu0 0.0
    %921 = vmatpush1.msra.mxu0 0.0
    %922 = vmatprep.subr.mxu0 0.0
    %923 = vmatpush1.msra.mxu0 0.0
    %924 = vmatprep.subr.mxu0 0.0
    %925 = vmatpush1.msra.mxu0 0.0
    %926 = vmatprep.subr.mxu0 0.0
    %927 = vmatpush1.msra.mxu0 0.0
    %928 = vmatprep.subr.mxu0 0.0
    %929 = vmatpush1.msra.mxu0 %v896
    %930 = vmatprep.subr.mxu0 0.0
    %931 = vmatpush1.msra.mxu0 %v895
    %932 = vmatprep.subr.mxu0 0.0
    %933 = vmatpush1.msra.mxu0 %v894
    %934 = vmatprep.subr.mxu0 0.0
    %935 = vmatpush1.msra.mxu0 %v893
    %936 = vmatprep.subr.mxu0 0.0
    %937 = vmatpush2.msra.mxu0 0.0
    %938 = vmatprep.subr.mxu0 0.0
    %939 = vmatpush2.msra.mxu0 0.0
    %940 = vmatprep.subr.mxu0 0.0
    %941 = vmatpush2.msra.mxu0 0.0
    %942 = vmatprep.subr.mxu0 0.0
    %943 = vmatpush2.msra.mxu0 0.0
    %944 = vmatprep.subr.mxu0 0.0
    %945 = vmatpush2.msra.mxu0 0.0
    %946 = vmatprep.subr.mxu0 0.0
    %947 = vmatpush2.msra.mxu0 0.0
    %948 = vmatprep.subr.mxu0 0.0
    %949 = vmatpush2.msra.mxu0 0.0
    %950 = vmatprep.subr.mxu0 0.0
    %951 = vmatpush2.msra.mxu0 0.0
    %952 = vmatprep.subr.mxu0 0.0
    %953 = vmatpush2.msra.mxu0 0.0
    %954 = vmatprep.subr.mxu0 0.0
    %955 = vmatpush2.msra.mxu0 0.0
    %956 = vmatprep.subr.mxu0 0.0
    %957 = vmatpush2.msra.mxu0 0.0
    %958 = vmatprep.subr.mxu0 0.0
    %959 = vmatpush2.msra.mxu0 0.0
    %960 = vmatprep.subr.mxu0 0.0
    %961 = vmatpush2.msra.mxu0 0.0
    %962 = vmatprep.subr.mxu0 0.0
    %963 = vmatpush2.msra.mxu0 0.0
    %964 = vmatprep.subr.mxu0 0.0
    %965 = vmatpush2.msra.mxu0 0.0
    %966 = vmatprep.subr.mxu0 0.0
    %967 = vmatpush2.msra.mxu0 0.0
    %968 = vmatprep.mubr.f32.mxu0 0.0
    %969 = vmatmul.mubr.f32.gmra.mxu0 %v902
    %v970 = vpop.f32.mrf.mxu0
    %v971 = vadd.f32 %v900, %v970
    %v972 = vpop.f32.mrf.mxu0
    %973 = vdwg.mxu0
    %vm974 = vcmp.ge.f32.partialorder %v971, 0.0
    %v975 = vmul.f32 %v971, 0.01
    %v976 = vsel %vm974, %v971, %v975
    %v977 = vld [vmem:[#allocation5 + $0x1c0] sm:$0xff]
    %v978 = vld [vmem:[#allocation5 + $0x1c8] sm:$0xff]
    %v979 = vld [vmem:[#allocation5 + $0x1d0] sm:$0xff]
    %v980 = vld [vmem:[#allocation5 + $0x1d8] sm:$0xff]
    %v981 = vlaneseq
    %v982 = vshrl.u32 %v981, 7
    %v983 = vsub.s32 0, %v982
    %v984 = vrot.slane %v39, %v983
    %v986 = vsel %vm387, %v976, 0
    %988 = vmatprep.subr.mxu0 0.0
    %989 = vmatpush1.msra.mxu0 0.0
    %990 = vmatprep.subr.mxu0 0.0
    %991 = vmatpush1.msra.mxu0 0.0
    %992 = vmatprep.subr.mxu0 0.0
    %993 = vmatpush1.msra.mxu0 0.0
    %994 = vmatprep.subr.mxu0 0.0
    %995 = vmatpush1.msra.mxu0 0.0
    %996 = vmatprep.subr.mxu0 0.0
    %997 = vmatpush1.msra.mxu0 0.0
    %998 = vmatprep.subr.mxu0 0.0
    %999 = vmatpush1.msra.mxu0 0.0
    %1000 = vmatprep.subr.mxu0 0.0
    %1001 = vmatpush1.msra.mxu0 0.0
    %1002 = vmatprep.subr.mxu0 0.0
    %1003 = vmatpush1.msra.mxu0 0.0
    %1004 = vmatprep.subr.mxu0 0.0
    %1005 = vmatpush1.msra.mxu0 0.0
    %1006 = vmatprep.subr.mxu0 0.0
    %1007 = vmatpush1.msra.mxu0 0.0
    %1008 = vmatprep.subr.mxu0 0.0
    %1009 = vmatpush1.msra.mxu0 0.0
    %1010 = vmatprep.subr.mxu0 0.0
    %1011 = vmatpush1.msra.mxu0 0.0
    %1012 = vmatprep.subr.mxu0 0.0
    %1013 = vmatpush1.msra.mxu0 %v980
    %1014 = vmatprep.subr.mxu0 0.0
    %1015 = vmatpush1.msra.mxu0 %v979
    %1016 = vmatprep.subr.mxu0 0.0
    %1017 = vmatpush1.msra.mxu0 %v978
    %1018 = vmatprep.subr.mxu0 0.0
    %1019 = vmatpush1.msra.mxu0 %v977
    %1020 = vmatprep.subr.mxu0 0.0
    %1021 = vmatpush2.msra.mxu0 0.0
    %1022 = vmatprep.subr.mxu0 0.0
    %1023 = vmatpush2.msra.mxu0 0.0
    %1024 = vmatprep.subr.mxu0 0.0
    %1025 = vmatpush2.msra.mxu0 0.0
    %1026 = vmatprep.subr.mxu0 0.0
    %1027 = vmatpush2.msra.mxu0 0.0
    %1028 = vmatprep.subr.mxu0 0.0
    %1029 = vmatpush2.msra.mxu0 0.0
    %1030 = vmatprep.subr.mxu0 0.0
    %1031 = vmatpush2.msra.mxu0 0.0
    %1032 = vmatprep.subr.mxu0 0.0
    %1033 = vmatpush2.msra.mxu0 0.0
    %1034 = vmatprep.subr.mxu0 0.0
    %1035 = vmatpush2.msra.mxu0 0.0
    %1036 = vmatprep.subr.mxu0 0.0
    %1037 = vmatpush2.msra.mxu0 0.0
    %1038 = vmatprep.subr.mxu0 0.0
    %1039 = vmatpush2.msra.mxu0 0.0
    %1040 = vmatprep.subr.mxu0 0.0
    %1041 = vmatpush2.msra.mxu0 0.0
    %1042 = vmatprep.subr.mxu0 0.0
    %1043 = vmatpush2.msra.mxu0 0.0
    %1044 = vmatprep.subr.mxu0 0.0
    %1045 = vmatpush2.msra.mxu0 0.0
    %1046 = vmatprep.subr.mxu0 0.0
    %1047 = vmatpush2.msra.mxu0 0.0
    %1048 = vmatprep.subr.mxu0 0.0
    %1049 = vmatpush2.msra.mxu0 0.0
    %1050 = vmatprep.subr.mxu0 0.0
    %1051 = vmatpush2.msra.mxu0 0.0
    %1052 = vmatprep.mubr.f32.mxu0 0.0
    %1053 = vmatmul.mubr.f32.gmra.mxu0 %v986
    %v1054 = vpop.f32.mrf.mxu0
    %v1055 = vadd.f32 %v984, %v1054
    %v1056 = vpop.f32.mrf.mxu0
    %1057 = vdwg.mxu0
    %1059 = vrot.lane.b32.xlu0 %v971, 96
    %v1060 = vpop.permute.xlu0 %1059
    %v1062 = vadd.f32 %v1055, %v1060
    %v1063 = vadd.f32 %v720, %v1062
    %v1064 = vld [vmem:[#allocation5 + $0x1e0] sm:$0xff]
    %v1065 = vld [vmem:[#allocation5 + $0x1e8] sm:$0xff]
    %v1066 = vld [vmem:[#allocation5 + $0x1f0] sm:$0xff]
    %v1067 = vld [vmem:[#allocation5 + $0x1f8] sm:$0xff]
    %v1068 = vlaneseq
    %v1069 = vshrl.u32 %v1068, 7
    %v1070 = vsub.s32 1, %v1069
    %v1071 = vrot.slane %v39, %v1070
    %v1073 = vsel %vm387, %v1063, 0
    %1075 = vmatprep.subr.mxu0 0.0
    %1076 = vmatpush1.msra.mxu0 0.0
    %1077 = vmatprep.subr.mxu0 0.0
    %1078 = vmatpush1.msra.mxu0 0.0
    %1079 = vmatprep.subr.mxu0 0.0
    %1080 = vmatpush1.msra.mxu0 0.0
    %1081 = vmatprep.subr.mxu0 0.0
    %1082 = vmatpush1.msra.mxu0 0.0
    %1083 = vmatprep.subr.mxu0 0.0
    %1084 = vmatpush1.msra.mxu0 0.0
    %1085 = vmatprep.subr.mxu0 0.0
    %1086 = vmatpush1.msra.mxu0 0.0
    %1087 = vmatprep.subr.mxu0 0.0
    %1088 = vmatpush1.msra.mxu0 0.0
    %1089 = vmatprep.subr.mxu0 0.0
    %1090 = vmatpush1.msra.mxu0 0.0
    %1091 = vmatprep.subr.mxu0 0.0
    %1092 = vmatpush1.msra.mxu0 0.0
    %1093 = vmatprep.subr.mxu0 0.0
    %1094 = vmatpush1.msra.mxu0 0.0
    %1095 = vmatprep.subr.mxu0 0.0
    %1096 = vmatpush1.msra.mxu0 0.0
    %1097 = vmatprep.subr.mxu0 0.0
    %1098 = vmatpush1.msra.mxu0 0.0
    %1099 = vmatprep.subr.mxu0 0.0
    %1100 = vmatpush1.msra.mxu0 %v1067
    %1101 = vmatprep.subr.mxu0 0.0
    %1102 = vmatpush1.msra.mxu0 %v1066
    %1103 = vmatprep.subr.mxu0 0.0
    %1104 = vmatpush1.msra.mxu0 %v1065
    %1105 = vmatprep.subr.mxu0 0.0
    %1106 = vmatpush1.msra.mxu0 %v1064
    %1107 = vmatprep.subr.mxu0 0.0
    %1108 = vmatpush2.msra.mxu0 0.0
    %1109 = vmatprep.subr.mxu0 0.0
    %1110 = vmatpush2.msra.mxu0 0.0
    %1111 = vmatprep.subr.mxu0 0.0
    %1112 = vmatpush2.msra.mxu0 0.0
    %1113 = vmatprep.subr.mxu0 0.0
    %1114 = vmatpush2.msra.mxu0 0.0
    %1115 = vmatprep.subr.mxu0 0.0
    %1116 = vmatpush2.msra.mxu0 0.0
    %1117 = vmatprep.subr.mxu0 0.0
    %1118 = vmatpush2.msra.mxu0 0.0
    %1119 = vmatprep.subr.mxu0 0.0
    %1120 = vmatpush2.msra.mxu0 0.0
    %1121 = vmatprep.subr.mxu0 0.0
    %1122 = vmatpush2.msra.mxu0 0.0
    %1123 = vmatprep.subr.mxu0 0.0
    %1124 = vmatpush2.msra.mxu0 0.0
    %1125 = vmatprep.subr.mxu0 0.0
    %1126 = vmatpush2.msra.mxu0 0.0
    %1127 = vmatprep.subr.mxu0 0.0
    %1128 = vmatpush2.msra.mxu0 0.0
    %1129 = vmatprep.subr.mxu0 0.0
    %1130 = vmatpush2.msra.mxu0 0.0
    %1131 = vmatprep.subr.mxu0 0.0
    %1132 = vmatpush2.msra.mxu0 0.0
    %1133 = vmatprep.subr.mxu0 0.0
    %1134 = vmatpush2.msra.mxu0 0.0
    %1135 = vmatprep.subr.mxu0 0.0
    %1136 = vmatpush2.msra.mxu0 0.0
    %1137 = vmatprep.subr.mxu0 0.0
    %1138 = vmatpush2.msra.mxu0 0.0
    %1139 = vmatprep.mubr.f32.mxu0 0.0
    %1140 = vmatmul.mubr.f32.gmra.mxu0 %v1073
    %v1141 = vpop.f32.mrf.mxu0
    %v1142 = vadd.f32 %v1071, %v1141
    %v1143 = vpop.f32.mrf.mxu0
    %1144 = vdwg.mxu0
    %vm1145 = vcmp.ge.f32.partialorder %v1142, 0.0
    %v1146 = vmul.f32 %v1142, 0.01
    %v1147 = vsel %vm1145, %v1142, %v1146
    %v1148 = vld [vmem:[#allocation5 + $0x200] sm:$0xff]
    %v1149 = vld [vmem:[#allocation5 + $0x208] sm:$0xff]
    %v1150 = vld [vmem:[#allocation5 + $0x210] sm:$0xff]
    %v1151 = vld [vmem:[#allocation5 + $0x218] sm:$0xff]
    %v1152 = vld [vmem:[#allocation5 + $0x220] sm:$0xff]
    %v1153 = vld [vmem:[#allocation5 + $0x228] sm:$0xff]
    %v1154 = vld [vmem:[#allocation5 + $0x230] sm:$0xff]
    %v1155 = vld [vmem:[#allocation5 + $0x238] sm:$0xff]
    %v1156 = vlaneseq
    %v1157 = vshrl.u32 %v1156, 7
    %v1158 = vsub.s32 2, %v1157
    %v1159 = vrot.slane %v39, %v1158
    %vm1160 = vcmask 523264
    %v1162 = vsel %vm1160, %v1147, 0
    %1164 = vmatprep.subr.mxu0 0.0
    %1165 = vmatpush1.msra.mxu0 0.0
    %1166 = vmatprep.subr.mxu0 0.0
    %1167 = vmatpush1.msra.mxu0 0.0
    %1168 = vmatprep.subr.mxu0 0.0
    %1169 = vmatpush1.msra.mxu0 0.0
    %1170 = vmatprep.subr.mxu0 0.0
    %1171 = vmatpush1.msra.mxu0 0.0
    %1172 = vmatprep.subr.mxu0 0.0
    %1173 = vmatpush1.msra.mxu0 0.0
    %1174 = vmatprep.subr.mxu0 0.0
    %1175 = vmatpush1.msra.mxu0 0.0
    %1176 = vmatprep.subr.mxu0 0.0
    %1177 = vmatpush1.msra.mxu0 0.0
    %1178 = vmatprep.subr.mxu0 0.0
    %1179 = vmatpush1.msra.mxu0 0.0
    %1180 = vmatprep.subr.mxu0 0.0
    %1181 = vmatpush1.msra.mxu0 %v1155
    %1182 = vmatprep.subr.mxu0 0.0
    %1183 = vmatpush1.msra.mxu0 %v1154
    %1184 = vmatprep.subr.mxu0 0.0
    %1185 = vmatpush1.msra.mxu0 %v1153
    %1186 = vmatprep.subr.mxu0 0.0
    %1187 = vmatpush1.msra.mxu0 %v1152
    %1188 = vmatprep.subr.mxu0 0.0
    %1189 = vmatpush1.msra.mxu0 %v1151
    %1190 = vmatprep.subr.mxu0 0.0
    %1191 = vmatpush1.msra.mxu0 %v1150
    %1192 = vmatprep.subr.mxu0 0.0
    %1193 = vmatpush1.msra.mxu0 %v1149
    %1194 = vmatprep.subr.mxu0 0.0
    %1195 = vmatpush1.msra.mxu0 %v1148
    %1196 = vmatprep.subr.mxu0 0.0
    %1197 = vmatpush2.msra.mxu0 0.0
    %1198 = vmatprep.subr.mxu0 0.0
    %1199 = vmatpush2.msra.mxu0 0.0
    %1200 = vmatprep.subr.mxu0 0.0
    %1201 = vmatpush2.msra.mxu0 0.0
    %1202 = vmatprep.subr.mxu0 0.0
    %1203 = vmatpush2.msra.mxu0 0.0
    %1204 = vmatprep.subr.mxu0 0.0
    %1205 = vmatpush2.msra.mxu0 0.0
    %1206 = vmatprep.subr.mxu0 0.0
    %1207 = vmatpush2.msra.mxu0 0.0
    %1208 = vmatprep.subr.mxu0 0.0
    %1209 = vmatpush2.msra.mxu0 0.0
    %1210 = vmatprep.subr.mxu0 0.0
    %1211 = vmatpush2.msra.mxu0 0.0
    %1212 = vmatprep.subr.mxu0 0.0
    %1213 = vmatpush2.msra.mxu0 0.0
    %1214 = vmatprep.subr.mxu0 0.0
    %1215 = vmatpush2.msra.mxu0 0.0
    %1216 = vmatprep.subr.mxu0 0.0
    %1217 = vmatpush2.msra.mxu0 0.0
    %1218 = vmatprep.subr.mxu0 0.0
    %1219 = vmatpush2.msra.mxu0 0.0
    %1220 = vmatprep.subr.mxu0 0.0
    %1221 = vmatpush2.msra.mxu0 0.0
    %1222 = vmatprep.subr.mxu0 0.0
    %1223 = vmatpush2.msra.mxu0 0.0
    %1224 = vmatprep.subr.mxu0 0.0
    %1225 = vmatpush2.msra.mxu0 0.0
    %1226 = vmatprep.subr.mxu0 0.0
    %1227 = vmatpush2.msra.mxu0 0.0
    %1228 = vmatprep.mubr.f32.mxu0 0.0
    %1229 = vmatmul.mubr.f32.gmra.mxu0 %v1162
    %v1230 = vpop.f32.mrf.mxu0
    %v1231 = vadd.f32 %v1159, %v1230
    %v1232 = vpop.f32.mrf.mxu0
    %1233 = vdwg.mxu0
    %1234 = vst [vmem:[#allocation7] sm:$0xff] %v1231
    // Predicated region
    $region18: #{tpu_custom_call.1} parent=1 // pred_check
      _
    $region19: #{tpu_custom_call.1} parent=1 // pred_check_branch
      %1236 = sbr.rel (0) target = $region21
    $region20: #{tpu_custom_call.1} parent=1 // pred_region
      %s1238 = ssub.s32 128, 128
      %1239 = vsyncadd [#allocation4], %s1238
      %s1241 = sshll.u32 [#allocation7], 4
      %s1242 = int_to_ptr.vmem [resolvable:$true] %s1241
      %1244 = dma.vmem_to_hbm [thread:$0]  %s1242, 128, %s2, [#allocation4]
    $region21: #{tpu_custom_call.1} parent=1 // pred_fallthru
      _
    // Predicated region
    $region22: #{tpu_custom_call.1} parent=1 // pred_check
      _
    $region23: #{tpu_custom_call.1} parent=1 // pred_check_branch
      %1246 = sbr.rel (0) target = $region25
    $region24: #{tpu_custom_call.1} parent=1 // pred_region
      %1247 = dma.done [#allocation4], 128
    $region25: #{tpu_custom_call.1} parent=1 // pred_fallthru
      _
    %1248 = vsyncpa [#allocation3], 1
    %1249 = vsyncpa [#allocation6], 1
    %1250 = vsyncpa [#allocation4], 1

</llo_original>
